<compile_context>
chip_gen: v5e
topology: v5e:2x2
jax: 0.10.0
libtpu: 0.0.40
codegen_flags: <defaults>
</compile_context>

<pallas_src>
import jax
import jax.numpy as jnp
from jax import lax
from jax.experimental import pallas as pl
from jax.experimental.pallas import tpu as pltpu

LANE = 128
_MIN_SPLIT = 512                      # split batch across >=2 tiles above 2x this
_VMEM_TABLE_BUDGET = 8 * 1024 * 1024  # bytes; larger tables use the fallback path


def _round_up(x, m):
    return (x + m - 1) // m * m


def _cdiv(a, b):
    return -(-a // b)


# ----------------------------------------------------------------------------
# Fused kernel: in-VMEM gather (one-hot matmul) + FM interaction + biases.
# ----------------------------------------------------------------------------
def _fused_fm_kernel(uidx_ref, iidx_ref, eu_t_ref, ei_t_ref, out_ref):
    """One batch tile.

    uidx_ref / iidx_ref : (1, TB) int32  per-tile user / item indices
    eu_t_ref            : (Fa, U) f32    bias-augmented, transposed user table (VMEM resident)
    ei_t_ref            : (Fa, I) f32    bias-augmented, transposed item table (VMEM resident)
    out_ref             : (1, TB) f32    lane-dense predictions
    """
    _, U = eu_t_ref.shape
    _, I = ei_t_ref.shape
    TB = out_ref.shape[1]

    # Exact row gather via one-hot matmul on the MXU (each output element is
    # 1.0 * table_value + zeros, so the gather is bit-exact in f32).
    oh_u = (lax.broadcasted_iota(jnp.int32, (U, TB), 0) == uidx_ref[...]).astype(jnp.float32)
    oh_i = (lax.broadcasted_iota(jnp.int32, (I, TB), 0) == iidx_ref[...]).astype(jnp.float32)
    gu = jnp.dot(eu_t_ref[...], oh_u, preferred_element_type=jnp.float32)   # (Fa, TB)
    gi = jnp.dot(ei_t_ref[...], oh_i, preferred_element_type=jnp.float32)   # (Fa, TB)

    # Bias columns were folded into the augmented tables, so this sublane-axis
    # reduction already includes u_bias + i_bias + bias_.  Result is lane-dense.
    out_ref[...] = jnp.sum(gu * gi, axis=0, keepdims=True)                  # (1, TB)


# ----------------------------------------------------------------------------
# Fallback kernel (large vocab): XLA gathers dense rows, kernel does the FM op.
# ----------------------------------------------------------------------------
def _dense_fm_kernel(eu_ref, ei_ref, bias_ref, out_ref):
    # eu/ei: (TB, F); bias: (TB, 1) = u_bias + i_bias + bias_; out: (TB, 1)
    out_ref[...] = (
        jnp.sum(eu_ref[...] * ei_ref[...], axis=-1, keepdims=True) + bias_ref[...]
    )


def _choose_tiling(B, tile_b):
    """Pick (eff_tile, num_tiles, B_pad) with lane-aligned tiles, bounded
    padding waste, and an even grid (>=2 when possible) for v7x megacore."""
    B_lane = _round_up(max(B, 1), LANE)
    max_tile = max(LANE, min(_round_up(tile_b, LANE), B_lane))
    nt = _cdiv(B_lane, max_tile)
    if nt == 1 and B_lane >= 2 * _MIN_SPLIT:
        nt = 2                       # use both TensorCores on v7x
    elif nt > 1 and nt % 2 == 1:
        nt += 1                      # even grid -> balanced core split
    eff_tile = _round_up(_cdiv(B_lane, nt), LANE)
    B_pad = eff_tile * nt
    return eff_tile, nt, B_pad


def _dense_forward(params, user_pad, item_pad, B, eff_tile, num_tiles, B_pad):
    # TODO(synk): replace with scalar-prefetched indices + per-row DMA gather
    #             for vocabularies that do not fit VMEM.
    F = params["embed_user"].shape[1]
    eu = params["embed_user"][user_pad]                                 # (B_pad, F)
    ei = params["embed_item"][item_pad]                                 # (B_pad, F)
    bias = params["u_bias"][user_pad] + params["i_bias"][item_pad] + params["bias_"]
    out = pl.pallas_call(
        _dense_fm_kernel,
        out_shape=jax.ShapeDtypeStruct((B_pad, 1), jnp.float32),
        grid=(num_tiles,),
        in_specs=[
            pl.BlockSpec((eff_tile, F), lambda i: (i, 0)),
            pl.BlockSpec((eff_tile, F), lambda i: (i, 0)),
            pl.BlockSpec((eff_tile, 1), lambda i: (i, 0)),
        ],
        out_specs=pl.BlockSpec((eff_tile, 1), lambda i: (i, 0)),
        compiler_params=pltpu.CompilerParams(
            dimension_semantics=("parallel",),
            vmem_limit_bytes=48 * 1024 * 1024,
        ),
    )(eu, ei, bias)
    return out.reshape(-1)[:B]


def pointfm_forward(params, user, item, *, tile_b=8192):
    """FM forward for feature=0. user/item: int (B,). Returns float32 (B,)."""
    B = int(user.shape[0])
    U, F = params["embed_user"].shape
    I = params["embed_item"].shape[0]

    eff_tile, num_tiles, B_pad = _choose_tiling(B, tile_b)

    user = user.astype(jnp.int32)
    item = item.astype(jnp.int32)
    pad = B_pad - B
    if pad:
        user = jnp.concatenate([user, jnp.zeros((pad,), jnp.int32)])
        item = jnp.concatenate([item, jnp.zeros((pad,), jnp.int32)])

    Fa = F + 2
    table_bytes = 4 * Fa * (U + I)
    if table_bytes > _VMEM_TABLE_BUDGET:
        return _dense_forward(params, user, item, B, eff_tile, num_tiles, B_pad)

    # Bias folding:  aug_u = [EU | u_bias | 1],  aug_i = [EI | 1 | i_bias + bias_]
    # => aug_u[u] . aug_i[i] = EU[u].EI[i] + u_bias[u] + i_bias[i] + bias_
    f32 = jnp.float32
    eu_t = jnp.concatenate(
        [params["embed_user"].astype(f32).T,
         params["u_bias"].astype(f32).T,
         jnp.ones((1, U), f32)], axis=0)                                  # (Fa, U)
    ei_t = jnp.concatenate(
        [params["embed_item"].astype(f32).T,
         jnp.ones((1, I), f32),
         (params["i_bias"].astype(f32) + params["bias_"].astype(f32)).T], axis=0)  # (Fa, I)

    uidx = user.reshape(1, B_pad)
    iidx = item.reshape(1, B_pad)

    flops = 2 * B_pad * Fa * (U + I) + 2 * B_pad * Fa
    bytes_accessed = 4 * (2 * B_pad + Fa * (U + I) + B_pad)

    out = pl.pallas_call(
        _fused_fm_kernel,
        out_shape=jax.ShapeDtypeStruct((1, B_pad), jnp.float32),
        grid=(num_tiles,),
        in_specs=[
            pl.BlockSpec((1, eff_tile), lambda i: (0, i)),   # user indices (per tile)
            pl.BlockSpec((1, eff_tile), lambda i: (0, i)),   # item indices (per tile)
            pl.BlockSpec((Fa, U), lambda i: (0, 0)),         # user table, VMEM resident
            pl.BlockSpec((Fa, I), lambda i: (0, 0)),         # item table, VMEM resident
        ],
        out_specs=pl.BlockSpec((1, eff_tile), lambda i: (0, i)),
        compiler_params=pltpu.CompilerParams(
            dimension_semantics=("parallel",),
            vmem_limit_bytes=48 * 1024 * 1024,
        ),
        cost_estimate=pl.CostEstimate(
            flops=flops, transcendentals=0, bytes_accessed=bytes_accessed),
    )(uidx, iidx, eu_t, ei_t)
    return out.reshape(-1)[:B]                    # == pred.view(-1)


def init_params(key, user_num, item_num, factors):
    """Deterministic parameter init mirroring PointFM.__init__ (feature=0)."""
    k_u, k_i = jax.random.split(key)
    return {
        "embed_user": jax.random.normal(k_u, (user_num, factors), jnp.float32),
        "embed_item": jax.random.normal(k_i, (item_num, factors), jnp.float32),
        "u_bias": jnp.zeros((user_num, 1), jnp.float32),
        "i_bias": jnp.zeros((item_num, 1), jnp.float32),
        "bias_": jnp.zeros((1,), jnp.float32),
    }


if __name__ == "__main__":
    user_num, item_num, factors = 200, 300, 84   # factors=84 matches module default
    batch = 1037                                 # not a multiple of the tile -> exercises padding

    key = jax.random.PRNGKey(0)
    k_params, k_user, k_item, k_ub, k_ib, k_b = jax.random.split(key, 6)

    params = init_params(k_params, user_num, item_num, factors)
    # Perturb biases (module init is zeros) so the bias path is actually checked.
    params["u_bias"] = 0.1 * jax.random.normal(k_ub, (user_num, 1), jnp.float32)
    params["i_bias"] = 0.1 * jax.random.normal(k_ib, (item_num, 1), jnp.float32)
    params["bias_"] = 0.1 * jax.random.normal(k_b, (1,), jnp.float32)

    user = jax.random.randint(k_user, (batch,), 0, user_num, dtype=jnp.int32)
    item = jax.random.randint(k_item, (batch,), 0, item_num, dtype=jnp.int32)

    pred = pointfm_forward(params, user, item)
    pred = jax.block_until_ready(pred)

    # reference check in plain JAX
    eu = params["embed_user"][user]
    ei = params["embed_item"][item]
    ref = (eu * ei).sum(-1) + params["u_bias"][user][:, 0] \
        + params["i_bias"][item][:, 0] + params["bias_"][0]
    assert pred.shape == (batch,)
    assert jnp.allclose(pred, ref, atol=1e-4, rtol=1e-5)

    print("KERNEL_OK")
</pallas_src>

<mosaic_0001>
module attributes {stable_mosaic.version = 11 : i64} {
  func.func @_fused_fm_kernel(%arg0: i32, %arg1: memref<1x640xi32, #tpu.memory_space<vmem>>, %arg2: memref<1x640xi32, #tpu.memory_space<vmem>>, %arg3: memref<86x200xf32, #tpu.memory_space<vmem>>, %arg4: memref<86x300xf32, #tpu.memory_space<vmem>>, %arg5: memref<1x640xf32, #tpu.memory_space<vmem>>) attributes {dimension_semantics = [#tpu.dimension_semantics<parallel>], iteration_bounds = array<i64: 2>, scalar_prefetch = 0 : i64, scratch_operands = 0 : i64, tpu.core_type = #tpu.core_type<tc>, window_params = [{transform_indices = @transform_0, window_bounds = array<i64: 1, 640>}, {transform_indices = @transform_1, window_bounds = array<i64: 1, 640>}, {pipeline_mode = #tpu.pipeline_mode<synchronous>, transform_indices = @transform_2, window_bounds = array<i64: 86, 200>}, {pipeline_mode = #tpu.pipeline_mode<synchronous>, transform_indices = @transform_3, window_bounds = array<i64: 86, 300>}, {transform_indices = @transform_4, window_bounds = array<i64: 1, 640>}]} {
    %0 = tpu.iota {dimensions = array<i32: 0>} : vector<200x640xi32>
    %c0 = arith.constant 0 : index
    %c0_0 = arith.constant 0 : index
    %1 = vector.load %arg1[%c0, %c0_0] : memref<1x640xi32, #tpu.memory_space<vmem>>, vector<1x640xi32>
    %2 = vector.broadcast %1 : vector<1x640xi32> to vector<200x640xi32>
    %3 = arith.cmpi eq, %0, %2 : vector<200x640xi32>
    %4 = arith.extui %3 : vector<200x640xi1> to vector<200x640xi32>
    %5 = arith.sitofp %4 : vector<200x640xi32> to vector<200x640xf32>
    %6 = tpu.iota {dimensions = array<i32: 0>} : vector<300x640xi32>
    %c0_1 = arith.constant 0 : index
    %c0_2 = arith.constant 0 : index
    %7 = vector.load %arg2[%c0_1, %c0_2] : memref<1x640xi32, #tpu.memory_space<vmem>>, vector<1x640xi32>
    %8 = vector.broadcast %7 : vector<1x640xi32> to vector<300x640xi32>
    %9 = arith.cmpi eq, %6, %8 : vector<300x640xi32>
    %10 = arith.extui %9 : vector<300x640xi1> to vector<300x640xi32>
    %11 = arith.sitofp %10 : vector<300x640xi32> to vector<300x640xf32>
    %c0_3 = arith.constant 0 : index
    %c0_4 = arith.constant 0 : index
    %12 = vector.load %arg3[%c0_3, %c0_4] : memref<86x200xf32, #tpu.memory_space<vmem>>, vector<86x200xf32>
    %cst = arith.constant dense<0.000000e+00> : vector<86x640xf32>
    %13 = tpu.matmul %12, %5, %cst {dimension_numbers = #tpu.dot_dimension_numbers<[1], [0], [0], [1], [0, 0, 1, 1], [], []>} : vector<86x200xf32>, vector<200x640xf32>, vector<86x640xf32> -> vector<86x640xf32>
    %c0_5 = arith.constant 0 : index
    %c0_6 = arith.constant 0 : index
    %14 = vector.load %arg4[%c0_5, %c0_6] : memref<86x300xf32, #tpu.memory_space<vmem>>, vector<86x300xf32>
    %cst_7 = arith.constant dense<0.000000e+00> : vector<86x640xf32>
    %15 = tpu.matmul %14, %11, %cst_7 {dimension_numbers = #tpu.dot_dimension_numbers<[1], [0], [0], [1], [0, 0, 1, 1], [], []>} : vector<86x300xf32>, vector<300x640xf32>, vector<86x640xf32> -> vector<86x640xf32>
    %16 = arith.mulf %13, %15 : vector<86x640xf32>
    %cst_8 = arith.constant dense<0.000000e+00> : vector<640xf32>
    %17 = vector.multi_reduction <add>, %16, %cst_8 [0] : vector<86x640xf32> to vector<640xf32>
    %18 = vector.shape_cast %17 : vector<640xf32> to vector<1x640xf32>
    %c0_9 = arith.constant 0 : index
    %c0_10 = arith.constant 0 : index
    %19 = vector.load %arg5[%c0_9, %c0_10] : memref<1x640xf32, #tpu.memory_space<vmem>>, vector<1x640xf32>
    tpu.vector_store %arg5[%c0_9, %c0_10], %18 {strides = array<i32>} : memref<1x640xf32, #tpu.memory_space<vmem>>, vector<1x640xf32>,
    return
  }
  func.func @transform_0(%arg0: i32) -> (i32, i32) {
    %c0_i32 = arith.constant 0 : i32
    %c0_i32_0 = arith.constant 0 : i32
    return %c0_i32, %arg0 : i32, i32
  }
  func.func @transform_1(%arg0: i32) -> (i32, i32) {
    %c0_i32 = arith.constant 0 : i32
    %c0_i32_0 = arith.constant 0 : i32
    return %c0_i32, %arg0 : i32, i32
  }
  func.func @transform_2(%arg0: i32) -> (i32, i32) {
    %c0_i32 = arith.constant 0 : i32
    %c0_i32_0 = arith.constant 0 : i32
    %c0_i32_1 = arith.constant 0 : i32
    return %c0_i32, %c0_i32_0 : i32, i32
  }
  func.func @transform_3(%arg0: i32) -> (i32, i32) {
    %c0_i32 = arith.constant 0 : i32
    %c0_i32_0 = arith.constant 0 : i32
    %c0_i32_1 = arith.constant 0 : i32
    return %c0_i32, %c0_i32_0 : i32, i32
  }
  func.func @transform_4(%arg0: i32) -> (i32, i32) {
    %c0_i32 = arith.constant 0 : i32
    %c0_i32_0 = arith.constant 0 : i32
    return %c0_i32, %arg0 : i32, i32
  }
}

</mosaic_0001>

<llo_original>
// kernel: tpu_custom_call.1
$region0: #{tpu_custom_call.1}
  #allocation0 [shape = 'u32[]', space=smem, size = 0x4, offset = 0x4, fixed_abs, tag = 'smem constant byte address 0x4 - core index']
  #allocation1 [shape = 'u32[72,128]{1,0:T(1,128)}', space=vmem, size = 0x9000, scoped, tag = 'internal scratch']
  %s0 = inlined_call_operand.hbm [shape: s32[1,1280], index: 0, kind: input, shape index: {}]
  %s1 = inlined_call_operand.hbm [shape: s32[1,1280], index: 1, kind: input, shape index: {}]
  %s2 = inlined_call_operand.hbm [shape: f32[86,200], index: 2, kind: input, shape index: {}]
  %s3 = inlined_call_operand.hbm [shape: f32[86,300], index: 3, kind: input, shape index: {}]
  %s4 = inlined_call_operand.hbm [shape: f32[1,1280], index: 4, kind: output, shape index: {}]
  %s5 = sld [smem:[#allocation0]]
  $region65: #{tpu_custom_call.1} parent=0
    _
  %s7 = ssub.s32 1, %s5
  %s8 = scalar_select 0, %s7, %s5
  $region1: #{tpu_custom_call.1} parent=0
    #allocation2 [shape = 'u8[5120]{0}', space=vmem, size = 0x1400, scoped, tag = 'input window, operand 0']
    #allocation3 [shape = 's32[2]{0}', space=sflag, size = 0x8, scoped, tag = 'scoped memory for tpu_custom_call.1']
    #allocation4 [shape = 's32[2]{0}', space=sflag, size = 0x8, scoped, tag = 'scoped memory for tpu_custom_call.1']
    #allocation5 [shape = 'u8[5120]{0}', space=vmem, size = 0x1400, scoped, tag = 'input window, operand 1']
    #allocation6 [shape = 's32[2]{0}', space=sflag, size = 0x8, scoped, tag = 'scoped memory for tpu_custom_call.1']
    #allocation7 [shape = 'u8[90112]{0}', space=vmem, size = 0x16000, scoped, tag = 'input window, operand 2, single buffered']
    #allocation8 [shape = 'u8[135168]{0}', space=vmem, size = 0x21000, scoped, tag = 'input window, operand 3, single buffered']
    #allocation9 [shape = 's32[1]{0}', space=sflag, size = 0x4, scoped, tag = 'scoped memory for tpu_custom_call.1']
    #allocation10 [shape = 'u8[5120]{0}', space=vmem, size = 0x1400, scoped, tag = 'output window, operand 0']
    %9 = vsyncpa [#allocation3], 0
    %s10 = scalar_lea.sflag [#allocation3], 1
    %11 = vsyncpa %s10, 0
    %12 = vsyncpa [#allocation6], 0
    %s13 = scalar_lea.sflag [#allocation6], 1
    %14 = vsyncpa %s13, 0
    %15 = vsyncpa [#allocation9], 0
    %16 = vsyncpa [#allocation4], 0
    %s17 = scalar_lea.sflag [#allocation4], 1
    %18 = vsyncpa %s17, 0
    loop: start=0, step=1, limit=4
    $region2: #{tpu_custom_call.1} parent=1 // loop_pre_header
      _
    $region3: #{tpu_custom_call.1} parent=1 // loop_header
      %s20 = sphi 0, %s24
      %p21 = scmp.ge.s32.totalorder %s20, 4
      %s30 = sphi 0, %s32
      %s33 = sphi 0, %s30
      %s34 = sphi 0, %s33
      %s50 = sphi 0, %s34
      %s56 = sphi 0, %s58
      %s59 = sphi 0, %s56
      %s60 = sphi 0, %s59
      %s76 = sphi 0, %s60
      %s80 = sphi 0, %s80
      %s82 = sphi 0, %s80
      %s83 = sphi 0, %s82
      %s97 = sphi 0, %s83
      %s101 = sphi 0, %s101
      %s103 = sphi 0, %s101
      %s104 = sphi 0, %s103
      %s118 = sphi 0, %s104
      %s124 = sphi 0, %s126
      %s127 = sphi 0, %s124
      %s128 = sphi 0, %s127
      %s144 = sphi 0, %s128
    $region4: #{tpu_custom_call.1} parent=1 // loop_header_branch
      %23 = sbr.rel (%p21) target = $region8
    $region5: #{tpu_custom_call.1} parent=1 // loop_body
      %s25 = ssub.s32 %s20, 1
      %s26 = ssub.s32 %s20, 2
      %s27 = sadd.s32 %s20, 1
      %s28 = ssub.s32 %s20, %s27
      %p29 = scmp.eq.s32.totalorder %s28, 0
      %s31 = sadd.s32 %s30, 1
      %s32 = scalar_select %p29, %s30, %s31
      %p35 = pneg %p29
      %p36 = scmp.eq.s32.totalorder %s20, 1
      %p37 = por %p35, %p36
      %p38 = scmp.ne.s32.totalorder %s30, %s33
      %p39 = scmp.eq.s32.totalorder %s20, 0
      %p40 = por %p38, %p39
      %p41 = scmp.ne.s32.totalorder %s30, %s33
      %p42 = scmp.eq.s32.totalorder %s25, 1
      %p43 = por %p41, %p42
      %p44 = scmp.ne.s32.totalorder %s33, %s34
      %p45 = scmp.eq.s32.totalorder %s25, 0
      %p46 = por %p44, %p45
      %p47 = scmp.ne.s32.totalorder %s33, %s34
      %p48 = scmp.eq.s32.totalorder %s26, 1
      %p49 = por %p47, %p48
      %p51 = scmp.ne.s32.totalorder %s34, %s50
      %p52 = scmp.eq.s32.totalorder %s26, 0
      %p53 = por %p51, %p52
      %s54 = ssub.s32 %s20, %s27
      %p55 = scmp.eq.s32.totalorder %s54, 0
      %s57 = sadd.s32 %s56, 1
      %s58 = scalar_select %p55, %s56, %s57
      %p61 = pneg %p55
      %p62 = scmp.eq.s32.totalorder %s20, 1
      %p63 = por %p61, %p62
      %p64 = scmp.ne.s32.totalorder %s56, %s59
      %p65 = scmp.eq.s32.totalorder %s20, 0
      %p66 = por %p64, %p65
      %p67 = scmp.ne.s32.totalorder %s56, %s59
      %p68 = scmp.eq.s32.totalorder %s25, 1
      %p69 = por %p67, %p68
      %p70 = scmp.ne.s32.totalorder %s59, %s60
      %p71 = scmp.eq.s32.totalorder %s25, 0
      %p72 = por %p70, %p71
      %p73 = scmp.ne.s32.totalorder %s59, %s60
      %p74 = scmp.eq.s32.totalorder %s26, 1
      %p75 = por %p73, %p74
      %p77 = scmp.ne.s32.totalorder %s60, %s76
      %p78 = scmp.eq.s32.totalorder %s26, 0
      %p79 = por %p77, %p78
      %s81 = sadd.s32 %s80, 1
      %p84 = scmp.eq.s32.totalorder %s20, 1
      %p85 = scmp.ne.s32.totalorder %s80, %s82
      %p86 = scmp.eq.s32.totalorder %s20, 0
      %p87 = por %p85, %p86
      %p88 = scmp.ne.s32.totalorder %s80, %s82
      %p89 = scmp.eq.s32.totalorder %s25, 1
      %p90 = por %p88, %p89
      %p91 = scmp.ne.s32.totalorder %s82, %s83
      %p92 = scmp.eq.s32.totalorder %s25, 0
      %p93 = por %p91, %p92
      %p94 = scmp.ne.s32.totalorder %s82, %s83
      %p95 = scmp.eq.s32.totalorder %s26, 1
      %p96 = por %p94, %p95
      %p98 = scmp.ne.s32.totalorder %s83, %s97
      %p99 = scmp.eq.s32.totalorder %s26, 0
      %p100 = por %p98, %p99
      %s102 = sadd.s32 %s101, 1
      %p105 = scmp.eq.s32.totalorder %s20, 1
      %p106 = scmp.ne.s32.totalorder %s101, %s103
      %p107 = scmp.eq.s32.totalorder %s20, 0
      %p108 = por %p106, %p107
      %p109 = scmp.ne.s32.totalorder %s101, %s103
      %p110 = scmp.eq.s32.totalorder %s25, 1
      %p111 = por %p109, %p110
      %p112 = scmp.ne.s32.totalorder %s103, %s104
      %p113 = scmp.eq.s32.totalorder %s25, 0
      %p114 = por %p112, %p113
      %p115 = scmp.ne.s32.totalorder %s103, %s104
      %p116 = scmp.eq.s32.totalorder %s26, 1
      %p117 = por %p115, %p116
      %p119 = scmp.ne.s32.totalorder %s104, %s118
      %p120 = scmp.eq.s32.totalorder %s26, 0
      %p121 = por %p119, %p120
      %s122 = ssub.s32 %s20, %s27
      %p123 = scmp.eq.s32.totalorder %s122, 0
      %s125 = sadd.s32 %s124, 1
      %s126 = scalar_select %p123, %s124, %s125
      %p129 = pneg %p123
      %p130 = scmp.eq.s32.totalorder %s20, 1
      %p131 = por %p129, %p130
      %p132 = scmp.ne.s32.totalorder %s124, %s127
      %p133 = scmp.eq.s32.totalorder %s20, 0
      %p134 = por %p132, %p133
      %p135 = scmp.ne.s32.totalorder %s124, %s127
      %p136 = scmp.eq.s32.totalorder %s25, 1
      %p137 = por %p135, %p136
      %p138 = scmp.ne.s32.totalorder %s127, %s128
      %p139 = scmp.eq.s32.totalorder %s25, 0
      %p140 = por %p138, %p139
      %p141 = scmp.ne.s32.totalorder %s127, %s128
      %p142 = scmp.eq.s32.totalorder %s26, 1
      %p143 = por %p141, %p142
      %p145 = scmp.ne.s32.totalorder %s128, %s144
      %p146 = scmp.eq.s32.totalorder %s26, 0
      %p147 = por %p145, %p146
      %p148 = scmp.le.s32.totalorder 1, %s20
      %p149 = scmp.lt.s32.totalorder %s20, 3
      %p150 = pnand %p148, %p149
      %p151 = pneg %p150
      // Predicated region
      $region9: #{tpu_custom_call.1} parent=5 // pred_check
        _
      $region10: #{tpu_custom_call.1} parent=5 // pred_check_branch
        %153 = sbr.rel (%p150) target = $region12
      $region11: #{tpu_custom_call.1} parent=5 // pred_region
        %s154 = ssub.s32 %s20, 1
        // Predicated region
        $region13: #{tpu_custom_call.1} parent=11 // pred_check
          %p155 = pneg %p93
        $region14: #{tpu_custom_call.1} parent=11 // pred_check_branch
          %157 = sbr.rel (%p155) target = $region16
        $region15: #{tpu_custom_call.1} parent=11 // pred_region
          %159 = vsyncadd [#allocation6], 0
          %s160 = sshll.u32 %s2, 4
          %s161 = int_to_ptr.hbm [resolvable:$true] %s160
          %s162 = sshll.u32 [#allocation7], 4
          %s163 = int_to_ptr.vmem [resolvable:$true] %s162
          %168 = dma.hbm_to_vmem [thread:$0]  %s161, 2816, %s163, [#allocation6], 256, 256, 16
        $region16: #{tpu_custom_call.1} parent=11 // pred_fallthru
          _
        // Predicated region
        $region17: #{tpu_custom_call.1} parent=11 // pred_check
          %p169 = pneg %p114
        $region18: #{tpu_custom_call.1} parent=11 // pred_check_branch
          %171 = sbr.rel (%p169) target = $region20
        $region19: #{tpu_custom_call.1} parent=11 // pred_region
          %173 = vsyncadd [#allocation9], 0
          %s174 = sshll.u32 %s3, 4
          %s175 = int_to_ptr.hbm [resolvable:$true] %s174
          %s176 = sshll.u32 [#allocation8], 4
          %s177 = int_to_ptr.vmem [resolvable:$true] %s176
          %182 = dma.hbm_to_vmem [thread:$0]  %s175, 4224, %s177, [#allocation9], 384, 384, 24
        $region20: #{tpu_custom_call.1} parent=11 // pred_fallthru
          _
      $region12: #{tpu_custom_call.1} parent=5 // pred_fallthru
        _
      %p183 = scmp.lt.s32.totalorder %s20, 2
      // Predicated region
      $region21: #{tpu_custom_call.1} parent=5 // pred_check
        %p184 = pneg %p183
      $region22: #{tpu_custom_call.1} parent=5 // pred_check_branch
        %186 = sbr.rel (%p184) target = $region24
      $region23: #{tpu_custom_call.1} parent=5 // pred_region
        // Predicated region
        $region25: #{tpu_custom_call.1} parent=23 // pred_check
          %p187 = pneg %p40
        $region26: #{tpu_custom_call.1} parent=23 // pred_check_branch
          %189 = sbr.rel (%p187) target = $region28
        $region27: #{tpu_custom_call.1} parent=23 // pred_region
          %s190 = sand.u32 %s30, 1
          %s191 = scalar_lea.sflag [#allocation3], %s190
          %s192 = sand.u32 %s30, 1
          %s193 = smul.addr %s192, 5
          %s194 = scalar_lea.vmem [#allocation2], %s193
          %s195 = smul.u32 5, %s20
          %197 = vsyncadd %s191, 0
          %s198 = scalar_lea.hbm %s0, %s195
          %s200 = sshll.u32 %s198, 4
          %s201 = int_to_ptr.hbm [resolvable:$true] %s200
          %s202 = sshll.u32 %s194, 4
          %s203 = int_to_ptr.vmem [resolvable:$true] %s202
          %205 = dma.hbm_to_vmem [thread:$0]  %s201, 80, %s203, %s191
        $region28: #{tpu_custom_call.1} parent=23 // pred_fallthru
          _
        // Predicated region
        $region29: #{tpu_custom_call.1} parent=23 // pred_check
          %p206 = pneg %p66
        $region30: #{tpu_custom_call.1} parent=23 // pred_check_branch
          %208 = sbr.rel (%p206) target = $region32
        $region31: #{tpu_custom_call.1} parent=23 // pred_region
          %s209 = sand.u32 %s20, 1
          %s210 = scalar_lea.sflag [#allocation6], %s209
          %s211 = sand.u32 %s56, 1
          %s212 = smul.addr %s211, 5
          %s213 = scalar_lea.vmem [#allocation5], %s212
          %s214 = smul.u32 5, %s20
          %216 = vsyncadd %s210, 0
          %s217 = scalar_lea.hbm %s1, %s214
          %s219 = sshll.u32 %s217, 4
          %s220 = int_to_ptr.hbm [resolvable:$true] %s219
          %s221 = sshll.u32 %s213, 4
          %s222 = int_to_ptr.vmem [resolvable:$true] %s221
          %224 = dma.hbm_to_vmem [thread:$0]  %s220, 80, %s222, %s210
        $region32: #{tpu_custom_call.1} parent=23 // pred_fallthru
          _
      $region24: #{tpu_custom_call.1} parent=5 // pred_fallthru
        _
      %p225 = scmp.le.s32.totalorder 1, %s20
      %p226 = scmp.lt.s32.totalorder %s20, 3
      %p227 = pnand %p225, %p226
      %p228 = pneg %p227
      // Predicated region
      $region33: #{tpu_custom_call.1} parent=5 // pred_check
        _
      $region34: #{tpu_custom_call.1} parent=5 // pred_check_branch
        %230 = sbr.rel (%p227) target = $region36
      $region35: #{tpu_custom_call.1} parent=5 // pred_region
        %s231 = ssub.s32 %s20, 1
        %s232 = sand.u32 %s33, 1
        %s233 = scalar_lea.sflag [#allocation3], %s232
        %s234 = sand.u32 %s33, 1
        %s235 = smul.addr %s234, 5
        %s236 = scalar_lea.vmem [#allocation2], %s235
        // Predicated region
        $region37: #{tpu_custom_call.1} parent=35 // pred_check
          %p237 = pneg %p46
        $region38: #{tpu_custom_call.1} parent=35 // pred_check_branch
          %239 = sbr.rel (%p237) target = $region40
        $region39: #{tpu_custom_call.1} parent=35 // pred_region
          %241 = dma.done %s233, 80
        $region40: #{tpu_custom_call.1} parent=35 // pred_fallthru
          _
        %s242 = sand.u32 %s25, 1
        %s243 = scalar_lea.sflag [#allocation6], %s242
        %s244 = sand.u32 %s59, 1
        %s245 = smul.addr %s244, 5
        %s246 = scalar_lea.vmem [#allocation5], %s245
        // Predicated region
        $region41: #{tpu_custom_call.1} parent=35 // pred_check
          %p247 = pneg %p72
        $region42: #{tpu_custom_call.1} parent=35 // pred_check_branch
          %249 = sbr.rel (%p247) target = $region44
        $region43: #{tpu_custom_call.1} parent=35 // pred_region
          %251 = dma.done %s243, 80
        $region44: #{tpu_custom_call.1} parent=35 // pred_fallthru
          _
        // Predicated region
        $region45: #{tpu_custom_call.1} parent=35 // pred_check
          %p252 = pneg %p93
        $region46: #{tpu_custom_call.1} parent=35 // pred_check_branch
          %254 = sbr.rel (%p252) target = $region48
        $region47: #{tpu_custom_call.1} parent=35 // pred_region
          %256 = dma.done [#allocation6], 2816
        $region48: #{tpu_custom_call.1} parent=35 // pred_fallthru
          _
        // Predicated region
        $region49: #{tpu_custom_call.1} parent=35 // pred_check
          %p257 = pneg %p114
        $region50: #{tpu_custom_call.1} parent=35 // pred_check_branch
          %259 = sbr.rel (%p257) target = $region52
        $region51: #{tpu_custom_call.1} parent=35 // pred_region
          %261 = dma.done [#allocation9], 4224
        $region52: #{tpu_custom_call.1} parent=35 // pred_fallthru
          _
        %s262 = sand.u32 %s33, 1
        %s263 = scalar_lea.sflag [#allocation3], %s262
        %s264 = sand.u32 %s33, 1
        %s265 = smul.addr %s264, 5
        %s266 = scalar_lea.vmem [#allocation2], %s265
        %p267 = pneg %p46
        %p268 = pneg %p43
        %s269 = sand.u32 %s25, 1
        %s270 = scalar_lea.sflag [#allocation6], %s269
        %s271 = sand.u32 %s59, 1
        %s272 = smul.addr %s271, 5
        %s273 = scalar_lea.vmem [#allocation5], %s272
        %p274 = pneg %p72
        %p275 = pneg %p69
        %p276 = pneg %p93
        %p277 = pneg %p90
        %p278 = pneg %p114
        %p279 = pneg %p111
        %p280 = pneg %p140
        %p281 = pneg %p137
        %s282 = sand.u32 %s127, 1
        %s283 = scalar_lea.sflag [#allocation4], %s282
        %s284 = sand.u32 %s127, 1
        %s285 = smul.addr %s284, 5
        %s286 = scalar_lea.vmem [#allocation10], %s285
        %s287 = smul.u32 5, %s25
        %s288 = smul.u32 5, %s25
        %s289 = smul.u32 5, %s25
        %v290 = vlaneseq
        %v291 = vshrl.u32 %v290, 7
        %v292 = vadd.s32 %v291, 8
        %v293 = vadd.s32 %v291, 16
        %v294 = vadd.s32 %v291, 24
        %v295 = vadd.s32 %v291, 32
        %v296 = vadd.s32 %v291, 40
        %v297 = vadd.s32 %v291, 48
        %v298 = vadd.s32 %v291, 56
        %v299 = vadd.s32 %v291, 64
        %v300 = vadd.s32 %v291, 72
        %v301 = vadd.s32 %v291, 80
        %v302 = vadd.s32 %v291, 88
        %v303 = vadd.s32 %v291, 96
        %v304 = vadd.s32 %v291, 104
        %v305 = vadd.s32 %v291, 112
        %v306 = vadd.s32 %v291, 120
        %v307 = vadd.s32 %v291, 128
        %v308 = vadd.s32 %v291, 136
        %v309 = vadd.s32 %v291, 144
        %v310 = vadd.s32 %v291, 152
        %v311 = vadd.s32 %v291, 160
        %v312 = vadd.s32 %v291, 168
        %v313 = vadd.s32 %v291, 176
        %v314 = vadd.s32 %v291, 184
        %v315 = vadd.s32 %v291, 192
        %v316 = vld [vmem:[%s236] sm:$0x1f]
        %v317 = vperm.slane %v316, 0
        %v318 = vperm.slane %v316, 1
        %v319 = vperm.slane %v316, 2
        %v320 = vperm.slane %v316, 3
        %v321 = vperm.slane %v316, 4
        %vm322 = vcmp.eq.s32.totalorder %v291, %v317
        %vm323 = vcmp.eq.s32.totalorder %v291, %v318
        %vm324 = vcmp.eq.s32.totalorder %v291, %v319
        %vm325 = vcmp.eq.s32.totalorder %v291, %v320
        %vm326 = vcmp.eq.s32.totalorder %v291, %v321
        %vm327 = vcmp.eq.s32.totalorder %v292, %v317
        %vm328 = vcmp.eq.s32.totalorder %v292, %v318
        %vm329 = vcmp.eq.s32.totalorder %v292, %v319
        %vm330 = vcmp.eq.s32.totalorder %v292, %v320
        %vm331 = vcmp.eq.s32.totalorder %v292, %v321
        %vm332 = vcmp.eq.s32.totalorder %v293, %v317
        %vm333 = vcmp.eq.s32.totalorder %v293, %v318
        %vm334 = vcmp.eq.s32.totalorder %v293, %v319
        %vm335 = vcmp.eq.s32.totalorder %v293, %v320
        %vm336 = vcmp.eq.s32.totalorder %v293, %v321
        %vm337 = vcmp.eq.s32.totalorder %v294, %v317
        %vm338 = vcmp.eq.s32.totalorder %v294, %v318
        %vm339 = vcmp.eq.s32.totalorder %v294, %v319
        %vm340 = vcmp.eq.s32.totalorder %v294, %v320
        %vm341 = vcmp.eq.s32.totalorder %v294, %v321
        %vm342 = vcmp.eq.s32.totalorder %v295, %v317
        %vm343 = vcmp.eq.s32.totalorder %v295, %v318
        %vm344 = vcmp.eq.s32.totalorder %v295, %v319
        %vm345 = vcmp.eq.s32.totalorder %v295, %v320
        %vm346 = vcmp.eq.s32.totalorder %v295, %v321
        %vm347 = vcmp.eq.s32.totalorder %v296, %v317
        %vm348 = vcmp.eq.s32.totalorder %v296, %v318
        %vm349 = vcmp.eq.s32.totalorder %v296, %v319
        %vm350 = vcmp.eq.s32.totalorder %v296, %v320
        %vm351 = vcmp.eq.s32.totalorder %v296, %v321
        %vm352 = vcmp.eq.s32.totalorder %v297, %v317
        %vm353 = vcmp.eq.s32.totalorder %v297, %v318
        %vm354 = vcmp.eq.s32.totalorder %v297, %v319
        %vm355 = vcmp.eq.s32.totalorder %v297, %v320
        %vm356 = vcmp.eq.s32.totalorder %v297, %v321
        %vm357 = vcmp.eq.s32.totalorder %v298, %v317
        %vm358 = vcmp.eq.s32.totalorder %v298, %v318
        %vm359 = vcmp.eq.s32.totalorder %v298, %v319
        %vm360 = vcmp.eq.s32.totalorder %v298, %v320
        %vm361 = vcmp.eq.s32.totalorder %v298, %v321
        %vm362 = vcmp.eq.s32.totalorder %v299, %v317
        %vm363 = vcmp.eq.s32.totalorder %v299, %v318
        %vm364 = vcmp.eq.s32.totalorder %v299, %v319
        %vm365 = vcmp.eq.s32.totalorder %v299, %v320
        %vm366 = vcmp.eq.s32.totalorder %v299, %v321
        %vm367 = vcmp.eq.s32.totalorder %v300, %v317
        %vm368 = vcmp.eq.s32.totalorder %v300, %v318
        %vm369 = vcmp.eq.s32.totalorder %v300, %v319
        %vm370 = vcmp.eq.s32.totalorder %v300, %v320
        %vm371 = vcmp.eq.s32.totalorder %v300, %v321
        %vm372 = vcmp.eq.s32.totalorder %v301, %v317
        %vm373 = vcmp.eq.s32.totalorder %v301, %v318
        %vm374 = vcmp.eq.s32.totalorder %v301, %v319
        %vm375 = vcmp.eq.s32.totalorder %v301, %v320
        %vm376 = vcmp.eq.s32.totalorder %v301, %v321
        %vm377 = vcmp.eq.s32.totalorder %v302, %v317
        %vm378 = vcmp.eq.s32.totalorder %v302, %v318
        %vm379 = vcmp.eq.s32.totalorder %v302, %v319
        %vm380 = vcmp.eq.s32.totalorder %v302, %v320
        %vm381 = vcmp.eq.s32.totalorder %v302, %v321
        %vm382 = vcmp.eq.s32.totalorder %v303, %v317
        %vm383 = vcmp.eq.s32.totalorder %v303, %v318
        %vm384 = vcmp.eq.s32.totalorder %v303, %v319
        %vm385 = vcmp.eq.s32.totalorder %v303, %v320
        %vm386 = vcmp.eq.s32.totalorder %v303, %v321
        %vm387 = vcmp.eq.s32.totalorder %v304, %v317
        %vm388 = vcmp.eq.s32.totalorder %v304, %v318
        %vm389 = vcmp.eq.s32.totalorder %v304, %v319
        %vm390 = vcmp.eq.s32.totalorder %v304, %v320
        %vm391 = vcmp.eq.s32.totalorder %v304, %v321
        %vm392 = vcmp.eq.s32.totalorder %v305, %v317
        %vm393 = vcmp.eq.s32.totalorder %v305, %v318
        %vm394 = vcmp.eq.s32.totalorder %v305, %v319
        %vm395 = vcmp.eq.s32.totalorder %v305, %v320
        %vm396 = vcmp.eq.s32.totalorder %v305, %v321
        %vm397 = vcmp.eq.s32.totalorder %v306, %v317
        %vm398 = vcmp.eq.s32.totalorder %v306, %v318
        %vm399 = vcmp.eq.s32.totalorder %v306, %v319
        %vm400 = vcmp.eq.s32.totalorder %v306, %v320
        %vm401 = vcmp.eq.s32.totalorder %v306, %v321
        %vm402 = vcmp.eq.s32.totalorder %v307, %v317
        %vm403 = vcmp.eq.s32.totalorder %v307, %v318
        %vm404 = vcmp.eq.s32.totalorder %v307, %v319
        %vm405 = vcmp.eq.s32.totalorder %v307, %v320
        %vm406 = vcmp.eq.s32.totalorder %v307, %v321
        %vm407 = vcmp.eq.s32.totalorder %v308, %v317
        %vm408 = vcmp.eq.s32.totalorder %v308, %v318
        %vm409 = vcmp.eq.s32.totalorder %v308, %v319
        %vm410 = vcmp.eq.s32.totalorder %v308, %v320
        %vm411 = vcmp.eq.s32.totalorder %v308, %v321
        %vm412 = vcmp.eq.s32.totalorder %v309, %v317
        %vm413 = vcmp.eq.s32.totalorder %v309, %v318
        %vm414 = vcmp.eq.s32.totalorder %v309, %v319
        %vm415 = vcmp.eq.s32.totalorder %v309, %v320
        %vm416 = vcmp.eq.s32.totalorder %v309, %v321
        %vm417 = vcmp.eq.s32.totalorder %v310, %v317
        %vm418 = vcmp.eq.s32.totalorder %v310, %v318
        %vm419 = vcmp.eq.s32.totalorder %v310, %v319
        %vm420 = vcmp.eq.s32.totalorder %v310, %v320
        %vm421 = vcmp.eq.s32.totalorder %v310, %v321
        %vm422 = vcmp.eq.s32.totalorder %v311, %v317
        %vm423 = vcmp.eq.s32.totalorder %v311, %v318
        %vm424 = vcmp.eq.s32.totalorder %v311, %v319
        %vm425 = vcmp.eq.s32.totalorder %v311, %v320
        %vm426 = vcmp.eq.s32.totalorder %v311, %v321
        %vm427 = vcmp.eq.s32.totalorder %v312, %v317
        %vm428 = vcmp.eq.s32.totalorder %v312, %v318
        %vm429 = vcmp.eq.s32.totalorder %v312, %v319
        %vm430 = vcmp.eq.s32.totalorder %v312, %v320
        %vm431 = vcmp.eq.s32.totalorder %v312, %v321
        %vm432 = vcmp.eq.s32.totalorder %v313, %v317
        %vm433 = vcmp.eq.s32.totalorder %v313, %v318
        %vm434 = vcmp.eq.s32.totalorder %v313, %v319
        %vm435 = vcmp.eq.s32.totalorder %v313, %v320
        %vm436 = vcmp.eq.s32.totalorder %v313, %v321
        %vm437 = vcmp.eq.s32.totalorder %v314, %v317
        %vm438 = vcmp.eq.s32.totalorder %v314, %v318
        %vm439 = vcmp.eq.s32.totalorder %v314, %v319
        %vm440 = vcmp.eq.s32.totalorder %v314, %v320
        %vm441 = vcmp.eq.s32.totalorder %v314, %v321
        %vm442 = vcmp.eq.s32.totalorder %v315, %v317
        %vm443 = vcmp.eq.s32.totalorder %v315, %v318
        %vm444 = vcmp.eq.s32.totalorder %v315, %v319
        %vm445 = vcmp.eq.s32.totalorder %v315, %v320
        %vm446 = vcmp.eq.s32.totalorder %v315, %v321
        %v447 = vsel %vm322, 1, 0
        %v448 = vsel %vm323, 1, 0
        %v449 = vsel %vm324, 1, 0
        %v450 = vsel %vm325, 1, 0
        %v451 = vsel %vm326, 1, 0
        %v452 = vsel %vm327, 1, 0
        %v453 = vsel %vm328, 1, 0
        %v454 = vsel %vm329, 1, 0
        %v455 = vsel %vm330, 1, 0
        %v456 = vsel %vm331, 1, 0
        %v457 = vsel %vm332, 1, 0
        %v458 = vsel %vm333, 1, 0
        %v459 = vsel %vm334, 1, 0
        %v460 = vsel %vm335, 1, 0
        %v461 = vsel %vm336, 1, 0
        %v462 = vsel %vm337, 1, 0
        %v463 = vsel %vm338, 1, 0
        %v464 = vsel %vm339, 1, 0
        %v465 = vsel %vm340, 1, 0
        %v466 = vsel %vm341, 1, 0
        %v467 = vsel %vm342, 1, 0
        %v468 = vsel %vm343, 1, 0
        %v469 = vsel %vm344, 1, 0
        %v470 = vsel %vm345, 1, 0
        %v471 = vsel %vm346, 1, 0
        %v472 = vsel %vm347, 1, 0
        %v473 = vsel %vm348, 1, 0
        %v474 = vsel %vm349, 1, 0
        %v475 = vsel %vm350, 1, 0
        %v476 = vsel %vm351, 1, 0
        %v477 = vsel %vm352, 1, 0
        %v478 = vsel %vm353, 1, 0
        %v479 = vsel %vm354, 1, 0
        %v480 = vsel %vm355, 1, 0
        %v481 = vsel %vm356, 1, 0
        %v482 = vsel %vm357, 1, 0
        %v483 = vsel %vm358, 1, 0
        %v484 = vsel %vm359, 1, 0
        %v485 = vsel %vm360, 1, 0
        %v486 = vsel %vm361, 1, 0
        %v487 = vsel %vm362, 1, 0
        %v488 = vsel %vm363, 1, 0
        %v489 = vsel %vm364, 1, 0
        %v490 = vsel %vm365, 1, 0
        %v491 = vsel %vm366, 1, 0
        %v492 = vsel %vm367, 1, 0
        %v493 = vsel %vm368, 1, 0
        %v494 = vsel %vm369, 1, 0
        %v495 = vsel %vm370, 1, 0
        %v496 = vsel %vm371, 1, 0
        %v497 = vsel %vm372, 1, 0
        %v498 = vsel %vm373, 1, 0
        %v499 = vsel %vm374, 1, 0
        %v500 = vsel %vm375, 1, 0
        %v501 = vsel %vm376, 1, 0
        %v502 = vsel %vm377, 1, 0
        %v503 = vsel %vm378, 1, 0
        %v504 = vsel %vm379, 1, 0
        %v505 = vsel %vm380, 1, 0
        %v506 = vsel %vm381, 1, 0
        %v507 = vsel %vm382, 1, 0
        %v508 = vsel %vm383, 1, 0
        %v509 = vsel %vm384, 1, 0
        %v510 = vsel %vm385, 1, 0
        %v511 = vsel %vm386, 1, 0
        %v512 = vsel %vm387, 1, 0
        %v513 = vsel %vm388, 1, 0
        %v514 = vsel %vm389, 1, 0
        %v515 = vsel %vm390, 1, 0
        %v516 = vsel %vm391, 1, 0
        %v517 = vsel %vm392, 1, 0
        %v518 = vsel %vm393, 1, 0
        %v519 = vsel %vm394, 1, 0
        %v520 = vsel %vm395, 1, 0
        %v521 = vsel %vm396, 1, 0
        %v522 = vsel %vm397, 1, 0
        %v523 = vsel %vm398, 1, 0
        %v524 = vsel %vm399, 1, 0
        %v525 = vsel %vm400, 1, 0
        %v526 = vsel %vm401, 1, 0
        %v527 = vsel %vm402, 1, 0
        %v528 = vsel %vm403, 1, 0
        %v529 = vsel %vm404, 1, 0
        %v530 = vsel %vm405, 1, 0
        %v531 = vsel %vm406, 1, 0
        %v532 = vsel %vm407, 1, 0
        %v533 = vsel %vm408, 1, 0
        %v534 = vsel %vm409, 1, 0
        %v535 = vsel %vm410, 1, 0
        %v536 = vsel %vm411, 1, 0
        %v537 = vsel %vm412, 1, 0
        %v538 = vsel %vm413, 1, 0
        %v539 = vsel %vm414, 1, 0
        %v540 = vsel %vm415, 1, 0
        %v541 = vsel %vm416, 1, 0
        %v542 = vsel %vm417, 1, 0
        %v543 = vsel %vm418, 1, 0
        %v544 = vsel %vm419, 1, 0
        %v545 = vsel %vm420, 1, 0
        %v546 = vsel %vm421, 1, 0
        %v547 = vsel %vm422, 1, 0
        %v548 = vsel %vm423, 1, 0
        %v549 = vsel %vm424, 1, 0
        %v550 = vsel %vm425, 1, 0
        %v551 = vsel %vm426, 1, 0
        %v552 = vsel %vm427, 1, 0
        %v553 = vsel %vm428, 1, 0
        %v554 = vsel %vm429, 1, 0
        %v555 = vsel %vm430, 1, 0
        %v556 = vsel %vm431, 1, 0
        %v557 = vsel %vm432, 1, 0
        %v558 = vsel %vm433, 1, 0
        %v559 = vsel %vm434, 1, 0
        %v560 = vsel %vm435, 1, 0
        %v561 = vsel %vm436, 1, 0
        %v562 = vsel %vm437, 1, 0
        %v563 = vsel %vm438, 1, 0
        %v564 = vsel %vm439, 1, 0
        %v565 = vsel %vm440, 1, 0
        %v566 = vsel %vm441, 1, 0
        %v567 = vsel %vm442, 1, 0
        %v568 = vsel %vm443, 1, 0
        %v569 = vsel %vm444, 1, 0
        %v570 = vsel %vm445, 1, 0
        %v571 = vsel %vm446, 1, 0
        %v572 = vcvt.s32.f32 %v447
        %v573 = vcvt.s32.f32 %v448
        %v574 = vcvt.s32.f32 %v449
        %v575 = vcvt.s32.f32 %v450
        %v576 = vcvt.s32.f32 %v451
        %v577 = vcvt.s32.f32 %v452
        %v578 = vcvt.s32.f32 %v453
        %v579 = vcvt.s32.f32 %v454
        %v580 = vcvt.s32.f32 %v455
        %v581 = vcvt.s32.f32 %v456
        %v582 = vcvt.s32.f32 %v457
        %v583 = vcvt.s32.f32 %v458
        %v584 = vcvt.s32.f32 %v459
        %v585 = vcvt.s32.f32 %v460
        %v586 = vcvt.s32.f32 %v461
        %v587 = vcvt.s32.f32 %v462
        %v588 = vcvt.s32.f32 %v463
        %v589 = vcvt.s32.f32 %v464
        %v590 = vcvt.s32.f32 %v465
        %v591 = vcvt.s32.f32 %v466
        %v592 = vcvt.s32.f32 %v467
        %v593 = vcvt.s32.f32 %v468
        %v594 = vcvt.s32.f32 %v469
        %v595 = vcvt.s32.f32 %v470
        %v596 = vcvt.s32.f32 %v471
        %v597 = vcvt.s32.f32 %v472
        %v598 = vcvt.s32.f32 %v473
        %v599 = vcvt.s32.f32 %v474
        %v600 = vcvt.s32.f32 %v475
        %v601 = vcvt.s32.f32 %v476
        %v602 = vcvt.s32.f32 %v477
        %v603 = vcvt.s32.f32 %v478
        %v604 = vcvt.s32.f32 %v479
        %v605 = vcvt.s32.f32 %v480
        %v606 = vcvt.s32.f32 %v481
        %v607 = vcvt.s32.f32 %v482
        %v608 = vcvt.s32.f32 %v483
        %v609 = vcvt.s32.f32 %v484
        %v610 = vcvt.s32.f32 %v485
        %v611 = vcvt.s32.f32 %v486
        %v612 = vcvt.s32.f32 %v487
        %v613 = vcvt.s32.f32 %v488
        %v614 = vcvt.s32.f32 %v489
        %v615 = vcvt.s32.f32 %v490
        %v616 = vcvt.s32.f32 %v491
        %v617 = vcvt.s32.f32 %v492
        %v618 = vcvt.s32.f32 %v493
        %v619 = vcvt.s32.f32 %v494
        %v620 = vcvt.s32.f32 %v495
        %v621 = vcvt.s32.f32 %v496
        %v622 = vcvt.s32.f32 %v497
        %v623 = vcvt.s32.f32 %v498
        %v624 = vcvt.s32.f32 %v499
        %v625 = vcvt.s32.f32 %v500
        %v626 = vcvt.s32.f32 %v501
        %v627 = vcvt.s32.f32 %v502
        %v628 = vcvt.s32.f32 %v503
        %v629 = vcvt.s32.f32 %v504
        %v630 = vcvt.s32.f32 %v505
        %v631 = vcvt.s32.f32 %v506
        %v632 = vcvt.s32.f32 %v507
        %v633 = vcvt.s32.f32 %v508
        %v634 = vcvt.s32.f32 %v509
        %v635 = vcvt.s32.f32 %v510
        %v636 = vcvt.s32.f32 %v511
        %v637 = vcvt.s32.f32 %v512
        %v638 = vcvt.s32.f32 %v513
        %v639 = vcvt.s32.f32 %v514
        %v640 = vcvt.s32.f32 %v515
        %v641 = vcvt.s32.f32 %v516
        %v642 = vcvt.s32.f32 %v517
        %v643 = vcvt.s32.f32 %v518
        %v644 = vcvt.s32.f32 %v519
        %v645 = vcvt.s32.f32 %v520
        %v646 = vcvt.s32.f32 %v521
        %v647 = vcvt.s32.f32 %v522
        %v648 = vcvt.s32.f32 %v523
        %v649 = vcvt.s32.f32 %v524
        %v650 = vcvt.s32.f32 %v525
        %v651 = vcvt.s32.f32 %v526
        %v652 = vcvt.s32.f32 %v527
        %v653 = vcvt.s32.f32 %v528
        %v654 = vcvt.s32.f32 %v529
        %v655 = vcvt.s32.f32 %v530
        %v656 = vcvt.s32.f32 %v531
        %v657 = vcvt.s32.f32 %v532
        %v658 = vcvt.s32.f32 %v533
        %v659 = vcvt.s32.f32 %v534
        %v660 = vcvt.s32.f32 %v535
        %v661 = vcvt.s32.f32 %v536
        %v662 = vcvt.s32.f32 %v537
        %v663 = vcvt.s32.f32 %v538
        %v664 = vcvt.s32.f32 %v539
        %v665 = vcvt.s32.f32 %v540
        %v666 = vcvt.s32.f32 %v541
        %v667 = vcvt.s32.f32 %v542
        %v668 = vcvt.s32.f32 %v543
        %v669 = vcvt.s32.f32 %v544
        %v670 = vcvt.s32.f32 %v545
        %v671 = vcvt.s32.f32 %v546
        %v672 = vcvt.s32.f32 %v547
        %v673 = vcvt.s32.f32 %v548
        %v674 = vcvt.s32.f32 %v549
        %v675 = vcvt.s32.f32 %v550
        %v676 = vcvt.s32.f32 %v551
        %v677 = vcvt.s32.f32 %v552
        %v678 = vcvt.s32.f32 %v553
        %v679 = vcvt.s32.f32 %v554
        %v680 = vcvt.s32.f32 %v555
        %v681 = vcvt.s32.f32 %v556
        %v682 = vcvt.s32.f32 %v557
        %v683 = vcvt.s32.f32 %v558
        %v684 = vcvt.s32.f32 %v559
        %v685 = vcvt.s32.f32 %v560
        %v686 = vcvt.s32.f32 %v561
        %v687 = vcvt.s32.f32 %v562
        %v688 = vcvt.s32.f32 %v563
        %v689 = vcvt.s32.f32 %v564
        %v690 = vcvt.s32.f32 %v565
        %v691 = vcvt.s32.f32 %v566
        %v692 = vcvt.s32.f32 %v567
        %v693 = vcvt.s32.f32 %v568
        %v694 = vcvt.s32.f32 %v569
        %v695 = vcvt.s32.f32 %v570
        %v696 = vcvt.s32.f32 %v571
        %v697 = vadd.s32 %v291, 200
        %v698 = vadd.s32 %v291, 208
        %v699 = vadd.s32 %v291, 216
        %v700 = vadd.s32 %v291, 224
        %v701 = vadd.s32 %v291, 232
        %v702 = vadd.s32 %v291, 240
        %v703 = vadd.s32 %v291, 248
        %v704 = vadd.s32 %v291, 256
        %v705 = vadd.s32 %v291, 264
        %v706 = vadd.s32 %v291, 272
        %v707 = vadd.s32 %v291, 280
        %v708 = vadd.s32 %v291, 288
        %v709 = vadd.s32 %v291, 296
        %v710 = vld [vmem:[%s246] sm:$0x1f]
        %v711 = vperm.slane %v710, 0
        %v712 = vperm.slane %v710, 1
        %v713 = vperm.slane %v710, 2
        %v714 = vperm.slane %v710, 3
        %v715 = vperm.slane %v710, 4
        %vm716 = vcmp.eq.s32.totalorder %v291, %v711
        %vm717 = vcmp.eq.s32.totalorder %v291, %v712
        %vm718 = vcmp.eq.s32.totalorder %v291, %v713
        %vm719 = vcmp.eq.s32.totalorder %v291, %v714
        %vm720 = vcmp.eq.s32.totalorder %v291, %v715
        %vm721 = vcmp.eq.s32.totalorder %v292, %v711
        %vm722 = vcmp.eq.s32.totalorder %v292, %v712
        %vm723 = vcmp.eq.s32.totalorder %v292, %v713
        %vm724 = vcmp.eq.s32.totalorder %v292, %v714
        %vm725 = vcmp.eq.s32.totalorder %v292, %v715
        %vm726 = vcmp.eq.s32.totalorder %v293, %v711
        %vm727 = vcmp.eq.s32.totalorder %v293, %v712
        %vm728 = vcmp.eq.s32.totalorder %v293, %v713
        %vm729 = vcmp.eq.s32.totalorder %v293, %v714
        %vm730 = vcmp.eq.s32.totalorder %v293, %v715
        %vm731 = vcmp.eq.s32.totalorder %v294, %v711
        %vm732 = vcmp.eq.s32.totalorder %v294, %v712
        %vm733 = vcmp.eq.s32.totalorder %v294, %v713
        %vm734 = vcmp.eq.s32.totalorder %v294, %v714
        %vm735 = vcmp.eq.s32.totalorder %v294, %v715
        %vm736 = vcmp.eq.s32.totalorder %v295, %v711
        %vm737 = vcmp.eq.s32.totalorder %v295, %v712
        %vm738 = vcmp.eq.s32.totalorder %v295, %v713
        %vm739 = vcmp.eq.s32.totalorder %v295, %v714
        %vm740 = vcmp.eq.s32.totalorder %v295, %v715
        %vm741 = vcmp.eq.s32.totalorder %v296, %v711
        %vm742 = vcmp.eq.s32.totalorder %v296, %v712
        %vm743 = vcmp.eq.s32.totalorder %v296, %v713
        %vm744 = vcmp.eq.s32.totalorder %v296, %v714
        %vm745 = vcmp.eq.s32.totalorder %v296, %v715
        %vm746 = vcmp.eq.s32.totalorder %v297, %v711
        %vm747 = vcmp.eq.s32.totalorder %v297, %v712
        %vm748 = vcmp.eq.s32.totalorder %v297, %v713
        %vm749 = vcmp.eq.s32.totalorder %v297, %v714
        %vm750 = vcmp.eq.s32.totalorder %v297, %v715
        %vm751 = vcmp.eq.s32.totalorder %v298, %v711
        %vm752 = vcmp.eq.s32.totalorder %v298, %v712
        %vm753 = vcmp.eq.s32.totalorder %v298, %v713
        %vm754 = vcmp.eq.s32.totalorder %v298, %v714
        %vm755 = vcmp.eq.s32.totalorder %v298, %v715
        %vm756 = vcmp.eq.s32.totalorder %v299, %v711
        %vm757 = vcmp.eq.s32.totalorder %v299, %v712
        %vm758 = vcmp.eq.s32.totalorder %v299, %v713
        %vm759 = vcmp.eq.s32.totalorder %v299, %v714
        %vm760 = vcmp.eq.s32.totalorder %v299, %v715
        %vm761 = vcmp.eq.s32.totalorder %v300, %v711
        %vm762 = vcmp.eq.s32.totalorder %v300, %v712
        %vm763 = vcmp.eq.s32.totalorder %v300, %v713
        %vm764 = vcmp.eq.s32.totalorder %v300, %v714
        %vm765 = vcmp.eq.s32.totalorder %v300, %v715
        %vm766 = vcmp.eq.s32.totalorder %v301, %v711
        %vm767 = vcmp.eq.s32.totalorder %v301, %v712
        %vm768 = vcmp.eq.s32.totalorder %v301, %v713
        %vm769 = vcmp.eq.s32.totalorder %v301, %v714
        %vm770 = vcmp.eq.s32.totalorder %v301, %v715
        %vm771 = vcmp.eq.s32.totalorder %v302, %v711
        %vm772 = vcmp.eq.s32.totalorder %v302, %v712
        %vm773 = vcmp.eq.s32.totalorder %v302, %v713
        %vm774 = vcmp.eq.s32.totalorder %v302, %v714
        %vm775 = vcmp.eq.s32.totalorder %v302, %v715
        %vm776 = vcmp.eq.s32.totalorder %v303, %v711
        %vm777 = vcmp.eq.s32.totalorder %v303, %v712
        %vm778 = vcmp.eq.s32.totalorder %v303, %v713
        %vm779 = vcmp.eq.s32.totalorder %v303, %v714
        %vm780 = vcmp.eq.s32.totalorder %v303, %v715
        %vm781 = vcmp.eq.s32.totalorder %v304, %v711
        %vm782 = vcmp.eq.s32.totalorder %v304, %v712
        %vm783 = vcmp.eq.s32.totalorder %v304, %v713
        %vm784 = vcmp.eq.s32.totalorder %v304, %v714
        %vm785 = vcmp.eq.s32.totalorder %v304, %v715
        %vm786 = vcmp.eq.s32.totalorder %v305, %v711
        %vm787 = vcmp.eq.s32.totalorder %v305, %v712
        %vm788 = vcmp.eq.s32.totalorder %v305, %v713
        %vm789 = vcmp.eq.s32.totalorder %v305, %v714
        %vm790 = vcmp.eq.s32.totalorder %v305, %v715
        %vm791 = vcmp.eq.s32.totalorder %v306, %v711
        %vm792 = vcmp.eq.s32.totalorder %v306, %v712
        %vm793 = vcmp.eq.s32.totalorder %v306, %v713
        %vm794 = vcmp.eq.s32.totalorder %v306, %v714
        %vm795 = vcmp.eq.s32.totalorder %v306, %v715
        %vm796 = vcmp.eq.s32.totalorder %v307, %v711
        %vm797 = vcmp.eq.s32.totalorder %v307, %v712
        %vm798 = vcmp.eq.s32.totalorder %v307, %v713
        %vm799 = vcmp.eq.s32.totalorder %v307, %v714
        %vm800 = vcmp.eq.s32.totalorder %v307, %v715
        %vm801 = vcmp.eq.s32.totalorder %v308, %v711
        %vm802 = vcmp.eq.s32.totalorder %v308, %v712
        %vm803 = vcmp.eq.s32.totalorder %v308, %v713
        %vm804 = vcmp.eq.s32.totalorder %v308, %v714
        %vm805 = vcmp.eq.s32.totalorder %v308, %v715
        %vm806 = vcmp.eq.s32.totalorder %v309, %v711
        %vm807 = vcmp.eq.s32.totalorder %v309, %v712
        %vm808 = vcmp.eq.s32.totalorder %v309, %v713
        %vm809 = vcmp.eq.s32.totalorder %v309, %v714
        %vm810 = vcmp.eq.s32.totalorder %v309, %v715
        %vm811 = vcmp.eq.s32.totalorder %v310, %v711
        %vm812 = vcmp.eq.s32.totalorder %v310, %v712
        %vm813 = vcmp.eq.s32.totalorder %v310, %v713
        %vm814 = vcmp.eq.s32.totalorder %v310, %v714
        %vm815 = vcmp.eq.s32.totalorder %v310, %v715
        %vm816 = vcmp.eq.s32.totalorder %v311, %v711
        %vm817 = vcmp.eq.s32.totalorder %v311, %v712
        %vm818 = vcmp.eq.s32.totalorder %v311, %v713
        %vm819 = vcmp.eq.s32.totalorder %v311, %v714
        %vm820 = vcmp.eq.s32.totalorder %v311, %v715
        %vm821 = vcmp.eq.s32.totalorder %v312, %v711
        %vm822 = vcmp.eq.s32.totalorder %v312, %v712
        %vm823 = vcmp.eq.s32.totalorder %v312, %v713
        %vm824 = vcmp.eq.s32.totalorder %v312, %v714
        %vm825 = vcmp.eq.s32.totalorder %v312, %v715
        %vm826 = vcmp.eq.s32.totalorder %v313, %v711
        %vm827 = vcmp.eq.s32.totalorder %v313, %v712
        %vm828 = vcmp.eq.s32.totalorder %v313, %v713
        %vm829 = vcmp.eq.s32.totalorder %v313, %v714
        %vm830 = vcmp.eq.s32.totalorder %v313, %v715
        %vm831 = vcmp.eq.s32.totalorder %v314, %v711
        %vm832 = vcmp.eq.s32.totalorder %v314, %v712
        %vm833 = vcmp.eq.s32.totalorder %v314, %v713
        %vm834 = vcmp.eq.s32.totalorder %v314, %v714
        %vm835 = vcmp.eq.s32.totalorder %v314, %v715
        %vm836 = vcmp.eq.s32.totalorder %v315, %v711
        %vm837 = vcmp.eq.s32.totalorder %v315, %v712
        %vm838 = vcmp.eq.s32.totalorder %v315, %v713
        %vm839 = vcmp.eq.s32.totalorder %v315, %v714
        %vm840 = vcmp.eq.s32.totalorder %v315, %v715
        %vm841 = vcmp.eq.s32.totalorder %v697, %v711
        %vm842 = vcmp.eq.s32.totalorder %v697, %v712
        %vm843 = vcmp.eq.s32.totalorder %v697, %v713
        %vm844 = vcmp.eq.s32.totalorder %v697, %v714
        %vm845 = vcmp.eq.s32.totalorder %v697, %v715
        %vm846 = vcmp.eq.s32.totalorder %v698, %v711
        %vm847 = vcmp.eq.s32.totalorder %v698, %v712
        %vm848 = vcmp.eq.s32.totalorder %v698, %v713
        %vm849 = vcmp.eq.s32.totalorder %v698, %v714
        %vm850 = vcmp.eq.s32.totalorder %v698, %v715
        %vm851 = vcmp.eq.s32.totalorder %v699, %v711
        %vm852 = vcmp.eq.s32.totalorder %v699, %v712
        %vm853 = vcmp.eq.s32.totalorder %v699, %v713
        %vm854 = vcmp.eq.s32.totalorder %v699, %v714
        %vm855 = vcmp.eq.s32.totalorder %v699, %v715
        %vm856 = vcmp.eq.s32.totalorder %v700, %v711
        %vm857 = vcmp.eq.s32.totalorder %v700, %v712
        %vm858 = vcmp.eq.s32.totalorder %v700, %v713
        %vm859 = vcmp.eq.s32.totalorder %v700, %v714
        %vm860 = vcmp.eq.s32.totalorder %v700, %v715
        %vm861 = vcmp.eq.s32.totalorder %v701, %v711
        %vm862 = vcmp.eq.s32.totalorder %v701, %v712
        %vm863 = vcmp.eq.s32.totalorder %v701, %v713
        %vm864 = vcmp.eq.s32.totalorder %v701, %v714
        %vm865 = vcmp.eq.s32.totalorder %v701, %v715
        %vm866 = vcmp.eq.s32.totalorder %v702, %v711
        %vm867 = vcmp.eq.s32.totalorder %v702, %v712
        %vm868 = vcmp.eq.s32.totalorder %v702, %v713
        %vm869 = vcmp.eq.s32.totalorder %v702, %v714
        %vm870 = vcmp.eq.s32.totalorder %v702, %v715
        %vm871 = vcmp.eq.s32.totalorder %v703, %v711
        %vm872 = vcmp.eq.s32.totalorder %v703, %v712
        %vm873 = vcmp.eq.s32.totalorder %v703, %v713
        %vm874 = vcmp.eq.s32.totalorder %v703, %v714
        %vm875 = vcmp.eq.s32.totalorder %v703, %v715
        %vm876 = vcmp.eq.s32.totalorder %v704, %v711
        %vm877 = vcmp.eq.s32.totalorder %v704, %v712
        %vm878 = vcmp.eq.s32.totalorder %v704, %v713
        %vm879 = vcmp.eq.s32.totalorder %v704, %v714
        %vm880 = vcmp.eq.s32.totalorder %v704, %v715
        %vm881 = vcmp.eq.s32.totalorder %v705, %v711
        %vm882 = vcmp.eq.s32.totalorder %v705, %v712
        %vm883 = vcmp.eq.s32.totalorder %v705, %v713
        %vm884 = vcmp.eq.s32.totalorder %v705, %v714
        %vm885 = vcmp.eq.s32.totalorder %v705, %v715
        %vm886 = vcmp.eq.s32.totalorder %v706, %v711
        %vm887 = vcmp.eq.s32.totalorder %v706, %v712
        %vm888 = vcmp.eq.s32.totalorder %v706, %v713
        %vm889 = vcmp.eq.s32.totalorder %v706, %v714
        %vm890 = vcmp.eq.s32.totalorder %v706, %v715
        %vm891 = vcmp.eq.s32.totalorder %v707, %v711
        %vm892 = vcmp.eq.s32.totalorder %v707, %v712
        %vm893 = vcmp.eq.s32.totalorder %v707, %v713
        %vm894 = vcmp.eq.s32.totalorder %v707, %v714
        %vm895 = vcmp.eq.s32.totalorder %v707, %v715
        %vm896 = vcmp.eq.s32.totalorder %v708, %v711
        %vm897 = vcmp.eq.s32.totalorder %v708, %v712
        %vm898 = vcmp.eq.s32.totalorder %v708, %v713
        %vm899 = vcmp.eq.s32.totalorder %v708, %v714
        %vm900 = vcmp.eq.s32.totalorder %v708, %v715
        %vm901 = vcmp.eq.s32.totalorder %v709, %v711
        %vm902 = vcmp.eq.s32.totalorder %v709, %v712
        %vm903 = vcmp.eq.s32.totalorder %v709, %v713
        %vm904 = vcmp.eq.s32.totalorder %v709, %v714
        %vm905 = vcmp.eq.s32.totalorder %v709, %v715
        %v906 = vsel %vm716, 1, 0
        %v907 = vsel %vm717, 1, 0
        %v908 = vsel %vm718, 1, 0
        %v909 = vsel %vm719, 1, 0
        %v910 = vsel %vm720, 1, 0
        %v911 = vsel %vm721, 1, 0
        %v912 = vsel %vm722, 1, 0
        %v913 = vsel %vm723, 1, 0
        %v914 = vsel %vm724, 1, 0
        %v915 = vsel %vm725, 1, 0
        %v916 = vsel %vm726, 1, 0
        %v917 = vsel %vm727, 1, 0
        %v918 = vsel %vm728, 1, 0
        %v919 = vsel %vm729, 1, 0
        %v920 = vsel %vm730, 1, 0
        %v921 = vsel %vm731, 1, 0
        %v922 = vsel %vm732, 1, 0
        %v923 = vsel %vm733, 1, 0
        %v924 = vsel %vm734, 1, 0
        %v925 = vsel %vm735, 1, 0
        %v926 = vsel %vm736, 1, 0
        %v927 = vsel %vm737, 1, 0
        %v928 = vsel %vm738, 1, 0
        %v929 = vsel %vm739, 1, 0
        %v930 = vsel %vm740, 1, 0
        %v931 = vsel %vm741, 1, 0
        %v932 = vsel %vm742, 1, 0
        %v933 = vsel %vm743, 1, 0
        %v934 = vsel %vm744, 1, 0
        %v935 = vsel %vm745, 1, 0
        %v936 = vsel %vm746, 1, 0
        %v937 = vsel %vm747, 1, 0
        %v938 = vsel %vm748, 1, 0
        %v939 = vsel %vm749, 1, 0
        %v940 = vsel %vm750, 1, 0
        %v941 = vsel %vm751, 1, 0
        %v942 = vsel %vm752, 1, 0
        %v943 = vsel %vm753, 1, 0
        %v944 = vsel %vm754, 1, 0
        %v945 = vsel %vm755, 1, 0
        %v946 = vsel %vm756, 1, 0
        %v947 = vsel %vm757, 1, 0
        %v948 = vsel %vm758, 1, 0
        %v949 = vsel %vm759, 1, 0
        %v950 = vsel %vm760, 1, 0
        %v951 = vsel %vm761, 1, 0
        %v952 = vsel %vm762, 1, 0
        %v953 = vsel %vm763, 1, 0
        %v954 = vsel %vm764, 1, 0
        %v955 = vsel %vm765, 1, 0
        %v956 = vsel %vm766, 1, 0
        %v957 = vsel %vm767, 1, 0
        %v958 = vsel %vm768, 1, 0
        %v959 = vsel %vm769, 1, 0
        %v960 = vsel %vm770, 1, 0
        %v961 = vsel %vm771, 1, 0
        %v962 = vsel %vm772, 1, 0
        %v963 = vsel %vm773, 1, 0
        %v964 = vsel %vm774, 1, 0
        %v965 = vsel %vm775, 1, 0
        %v966 = vsel %vm776, 1, 0
        %v967 = vsel %vm777, 1, 0
        %v968 = vsel %vm778, 1, 0
        %v969 = vsel %vm779, 1, 0
        %v970 = vsel %vm780, 1, 0
        %v971 = vsel %vm781, 1, 0
        %v972 = vsel %vm782, 1, 0
        %v973 = vsel %vm783, 1, 0
        %v974 = vsel %vm784, 1, 0
        %v975 = vsel %vm785, 1, 0
        %v976 = vsel %vm786, 1, 0
        %v977 = vsel %vm787, 1, 0
        %v978 = vsel %vm788, 1, 0
        %v979 = vsel %vm789, 1, 0
        %v980 = vsel %vm790, 1, 0
        %v981 = vsel %vm791, 1, 0
        %v982 = vsel %vm792, 1, 0
        %v983 = vsel %vm793, 1, 0
        %v984 = vsel %vm794, 1, 0
        %v985 = vsel %vm795, 1, 0
        %v986 = vsel %vm796, 1, 0
        %v987 = vsel %vm797, 1, 0
        %v988 = vsel %vm798, 1, 0
        %v989 = vsel %vm799, 1, 0
        %v990 = vsel %vm800, 1, 0
        %v991 = vsel %vm801, 1, 0
        %v992 = vsel %vm802, 1, 0
        %v993 = vsel %vm803, 1, 0
        %v994 = vsel %vm804, 1, 0
        %v995 = vsel %vm805, 1, 0
        %v996 = vsel %vm806, 1, 0
        %v997 = vsel %vm807, 1, 0
        %v998 = vsel %vm808, 1, 0
        %v999 = vsel %vm809, 1, 0
        %v1000 = vsel %vm810, 1, 0
        %v1001 = vsel %vm811, 1, 0
        %v1002 = vsel %vm812, 1, 0
        %v1003 = vsel %vm813, 1, 0
        %v1004 = vsel %vm814, 1, 0
        %v1005 = vsel %vm815, 1, 0
        %v1006 = vsel %vm816, 1, 0
        %v1007 = vsel %vm817, 1, 0
        %v1008 = vsel %vm818, 1, 0
        %v1009 = vsel %vm819, 1, 0
        %v1010 = vsel %vm820, 1, 0
        %v1011 = vsel %vm821, 1, 0
        %v1012 = vsel %vm822, 1, 0
        %v1013 = vsel %vm823, 1, 0
        %v1014 = vsel %vm824, 1, 0
        %v1015 = vsel %vm825, 1, 0
        %v1016 = vsel %vm826, 1, 0
        %v1017 = vsel %vm827, 1, 0
        %v1018 = vsel %vm828, 1, 0
        %v1019 = vsel %vm829, 1, 0
        %v1020 = vsel %vm830, 1, 0
        %v1021 = vsel %vm831, 1, 0
        %v1022 = vsel %vm832, 1, 0
        %v1023 = vsel %vm833, 1, 0
        %v1024 = vsel %vm834, 1, 0
        %v1025 = vsel %vm835, 1, 0
        %v1026 = vsel %vm836, 1, 0
        %v1027 = vsel %vm837, 1, 0
        %v1028 = vsel %vm838, 1, 0
        %v1029 = vsel %vm839, 1, 0
        %v1030 = vsel %vm840, 1, 0
        %v1031 = vsel %vm841, 1, 0
        %v1032 = vsel %vm842, 1, 0
        %v1033 = vsel %vm843, 1, 0
        %v1034 = vsel %vm844, 1, 0
        %v1035 = vsel %vm845, 1, 0
        %v1036 = vsel %vm846, 1, 0
        %v1037 = vsel %vm847, 1, 0
        %v1038 = vsel %vm848, 1, 0
        %v1039 = vsel %vm849, 1, 0
        %v1040 = vsel %vm850, 1, 0
        %v1041 = vsel %vm851, 1, 0
        %v1042 = vsel %vm852, 1, 0
        %v1043 = vsel %vm853, 1, 0
        %v1044 = vsel %vm854, 1, 0
        %v1045 = vsel %vm855, 1, 0
        %v1046 = vsel %vm856, 1, 0
        %v1047 = vsel %vm857, 1, 0
        %v1048 = vsel %vm858, 1, 0
        %v1049 = vsel %vm859, 1, 0
        %v1050 = vsel %vm860, 1, 0
        %v1051 = vsel %vm861, 1, 0
        %v1052 = vsel %vm862, 1, 0
        %v1053 = vsel %vm863, 1, 0
        %v1054 = vsel %vm864, 1, 0
        %v1055 = vsel %vm865, 1, 0
        %v1056 = vsel %vm866, 1, 0
        %v1057 = vsel %vm867, 1, 0
        %v1058 = vsel %vm868, 1, 0
        %v1059 = vsel %vm869, 1, 0
        %v1060 = vsel %vm870, 1, 0
        %v1061 = vsel %vm871, 1, 0
        %v1062 = vsel %vm872, 1, 0
        %v1063 = vsel %vm873, 1, 0
        %v1064 = vsel %vm874, 1, 0
        %v1065 = vsel %vm875, 1, 0
        %v1066 = vsel %vm876, 1, 0
        %v1067 = vsel %vm877, 1, 0
        %v1068 = vsel %vm878, 1, 0
        %v1069 = vsel %vm879, 1, 0
        %v1070 = vsel %vm880, 1, 0
        %v1071 = vsel %vm881, 1, 0
        %v1072 = vsel %vm882, 1, 0
        %v1073 = vsel %vm883, 1, 0
        %v1074 = vsel %vm884, 1, 0
        %v1075 = vsel %vm885, 1, 0
        %v1076 = vsel %vm886, 1, 0
        %v1077 = vsel %vm887, 1, 0
        %v1078 = vsel %vm888, 1, 0
        %v1079 = vsel %vm889, 1, 0
        %v1080 = vsel %vm890, 1, 0
        %v1081 = vsel %vm891, 1, 0
        %v1082 = vsel %vm892, 1, 0
        %v1083 = vsel %vm893, 1, 0
        %v1084 = vsel %vm894, 1, 0
        %v1085 = vsel %vm895, 1, 0
        %v1086 = vsel %vm896, 1, 0
        %v1087 = vsel %vm897, 1, 0
        %v1088 = vsel %vm898, 1, 0
        %v1089 = vsel %vm899, 1, 0
        %v1090 = vsel %vm900, 1, 0
        %v1091 = vsel %vm901, 1, 0
        %v1092 = vsel %vm902, 1, 0
        %v1093 = vsel %vm903, 1, 0
        %v1094 = vsel %vm904, 1, 0
        %v1095 = vsel %vm905, 1, 0
        %v1096 = vcvt.s32.f32 %v906
        %v1097 = vcvt.s32.f32 %v907
        %v1098 = vcvt.s32.f32 %v908
        %v1099 = vcvt.s32.f32 %v909
        %v1100 = vcvt.s32.f32 %v910
        %v1101 = vcvt.s32.f32 %v911
        %v1102 = vcvt.s32.f32 %v912
        %v1103 = vcvt.s32.f32 %v913
        %v1104 = vcvt.s32.f32 %v914
        %v1105 = vcvt.s32.f32 %v915
        %v1106 = vcvt.s32.f32 %v916
        %v1107 = vcvt.s32.f32 %v917
        %v1108 = vcvt.s32.f32 %v918
        %v1109 = vcvt.s32.f32 %v919
        %v1110 = vcvt.s32.f32 %v920
        %v1111 = vcvt.s32.f32 %v921
        %v1112 = vcvt.s32.f32 %v922
        %v1113 = vcvt.s32.f32 %v923
        %v1114 = vcvt.s32.f32 %v924
        %v1115 = vcvt.s32.f32 %v925
        %v1116 = vcvt.s32.f32 %v926
        %v1117 = vcvt.s32.f32 %v927
        %v1118 = vcvt.s32.f32 %v928
        %v1119 = vcvt.s32.f32 %v929
        %v1120 = vcvt.s32.f32 %v930
        %v1121 = vcvt.s32.f32 %v931
        %v1122 = vcvt.s32.f32 %v932
        %v1123 = vcvt.s32.f32 %v933
        %v1124 = vcvt.s32.f32 %v934
        %v1125 = vcvt.s32.f32 %v935
        %v1126 = vcvt.s32.f32 %v936
        %v1127 = vcvt.s32.f32 %v937
        %v1128 = vcvt.s32.f32 %v938
        %v1129 = vcvt.s32.f32 %v939
        %v1130 = vcvt.s32.f32 %v940
        %v1131 = vcvt.s32.f32 %v941
        %v1132 = vcvt.s32.f32 %v942
        %v1133 = vcvt.s32.f32 %v943
        %v1134 = vcvt.s32.f32 %v944
        %v1135 = vcvt.s32.f32 %v945
        %v1136 = vcvt.s32.f32 %v946
        %v1137 = vcvt.s32.f32 %v947
        %v1138 = vcvt.s32.f32 %v948
        %v1139 = vcvt.s32.f32 %v949
        %v1140 = vcvt.s32.f32 %v950
        %v1141 = vcvt.s32.f32 %v951
        %v1142 = vcvt.s32.f32 %v952
        %v1143 = vcvt.s32.f32 %v953
        %v1144 = vcvt.s32.f32 %v954
        %v1145 = vcvt.s32.f32 %v955
        %v1146 = vcvt.s32.f32 %v956
        %v1147 = vcvt.s32.f32 %v957
        %v1148 = vcvt.s32.f32 %v958
        %v1149 = vcvt.s32.f32 %v959
        %v1150 = vcvt.s32.f32 %v960
        %v1151 = vcvt.s32.f32 %v961
        %v1152 = vcvt.s32.f32 %v962
        %v1153 = vcvt.s32.f32 %v963
        %v1154 = vcvt.s32.f32 %v964
        %v1155 = vcvt.s32.f32 %v965
        %v1156 = vcvt.s32.f32 %v966
        %v1157 = vcvt.s32.f32 %v967
        %v1158 = vcvt.s32.f32 %v968
        %v1159 = vcvt.s32.f32 %v969
        %v1160 = vcvt.s32.f32 %v970
        %v1161 = vcvt.s32.f32 %v971
        %v1162 = vcvt.s32.f32 %v972
        %v1163 = vcvt.s32.f32 %v973
        %v1164 = vcvt.s32.f32 %v974
        %v1165 = vcvt.s32.f32 %v975
        %v1166 = vcvt.s32.f32 %v976
        %v1167 = vcvt.s32.f32 %v977
        %v1168 = vcvt.s32.f32 %v978
        %v1169 = vcvt.s32.f32 %v979
        %v1170 = vcvt.s32.f32 %v980
        %v1171 = vcvt.s32.f32 %v981
        %v1172 = vcvt.s32.f32 %v982
        %v1173 = vcvt.s32.f32 %v983
        %v1174 = vcvt.s32.f32 %v984
        %v1175 = vcvt.s32.f32 %v985
        %v1176 = vcvt.s32.f32 %v986
        %v1177 = vcvt.s32.f32 %v987
        %v1178 = vcvt.s32.f32 %v988
        %v1179 = vcvt.s32.f32 %v989
        %v1180 = vcvt.s32.f32 %v990
        %v1181 = vcvt.s32.f32 %v991
        %v1182 = vcvt.s32.f32 %v992
        %v1183 = vcvt.s32.f32 %v993
        %v1184 = vcvt.s32.f32 %v994
        %v1185 = vcvt.s32.f32 %v995
        %v1186 = vcvt.s32.f32 %v996
        %v1187 = vcvt.s32.f32 %v997
        %v1188 = vcvt.s32.f32 %v998
        %v1189 = vcvt.s32.f32 %v999
        %v1190 = vcvt.s32.f32 %v1000
        %v1191 = vcvt.s32.f32 %v1001
        %v1192 = vcvt.s32.f32 %v1002
        %v1193 = vcvt.s32.f32 %v1003
        %v1194 = vcvt.s32.f32 %v1004
        %v1195 = vcvt.s32.f32 %v1005
        %v1196 = vcvt.s32.f32 %v1006
        %v1197 = vcvt.s32.f32 %v1007
        %v1198 = vcvt.s32.f32 %v1008
        %v1199 = vcvt.s32.f32 %v1009
        %v1200 = vcvt.s32.f32 %v1010
        %v1201 = vcvt.s32.f32 %v1011
        %v1202 = vcvt.s32.f32 %v1012
        %v1203 = vcvt.s32.f32 %v1013
        %v1204 = vcvt.s32.f32 %v1014
        %v1205 = vcvt.s32.f32 %v1015
        %v1206 = vcvt.s32.f32 %v1016
        %v1207 = vcvt.s32.f32 %v1017
        %v1208 = vcvt.s32.f32 %v1018
        %v1209 = vcvt.s32.f32 %v1019
        %v1210 = vcvt.s32.f32 %v1020
        %v1211 = vcvt.s32.f32 %v1021
        %v1212 = vcvt.s32.f32 %v1022
        %v1213 = vcvt.s32.f32 %v1023
        %v1214 = vcvt.s32.f32 %v1024
        %v1215 = vcvt.s32.f32 %v1025
        %v1216 = vcvt.s32.f32 %v1026
        %v1217 = vcvt.s32.f32 %v1027
        %v1218 = vcvt.s32.f32 %v1028
        %v1219 = vcvt.s32.f32 %v1029
        %v1220 = vcvt.s32.f32 %v1030
        %v1221 = vcvt.s32.f32 %v1031
        %v1222 = vcvt.s32.f32 %v1032
        %v1223 = vcvt.s32.f32 %v1033
        %v1224 = vcvt.s32.f32 %v1034
        %v1225 = vcvt.s32.f32 %v1035
        %v1226 = vcvt.s32.f32 %v1036
        %v1227 = vcvt.s32.f32 %v1037
        %v1228 = vcvt.s32.f32 %v1038
        %v1229 = vcvt.s32.f32 %v1039
        %v1230 = vcvt.s32.f32 %v1040
        %v1231 = vcvt.s32.f32 %v1041
        %v1232 = vcvt.s32.f32 %v1042
        %v1233 = vcvt.s32.f32 %v1043
        %v1234 = vcvt.s32.f32 %v1044
        %v1235 = vcvt.s32.f32 %v1045
        %v1236 = vcvt.s32.f32 %v1046
        %v1237 = vcvt.s32.f32 %v1047
        %v1238 = vcvt.s32.f32 %v1048
        %v1239 = vcvt.s32.f32 %v1049
        %v1240 = vcvt.s32.f32 %v1050
        %v1241 = vcvt.s32.f32 %v1051
        %v1242 = vcvt.s32.f32 %v1052
        %v1243 = vcvt.s32.f32 %v1053
        %v1244 = vcvt.s32.f32 %v1054
        %v1245 = vcvt.s32.f32 %v1055
        %v1246 = vcvt.s32.f32 %v1056
        %v1247 = vcvt.s32.f32 %v1057
        %v1248 = vcvt.s32.f32 %v1058
        %v1249 = vcvt.s32.f32 %v1059
        %v1250 = vcvt.s32.f32 %v1060
        %v1251 = vcvt.s32.f32 %v1061
        %v1252 = vcvt.s32.f32 %v1062
        %v1253 = vcvt.s32.f32 %v1063
        %v1254 = vcvt.s32.f32 %v1064
        %v1255 = vcvt.s32.f32 %v1065
        %v1256 = vcvt.s32.f32 %v1066
        %v1257 = vcvt.s32.f32 %v1067
        %v1258 = vcvt.s32.f32 %v1068
        %v1259 = vcvt.s32.f32 %v1069
        %v1260 = vcvt.s32.f32 %v1070
        %v1261 = vcvt.s32.f32 %v1071
        %v1262 = vcvt.s32.f32 %v1072
        %v1263 = vcvt.s32.f32 %v1073
        %v1264 = vcvt.s32.f32 %v1074
        %v1265 = vcvt.s32.f32 %v1075
        %v1266 = vcvt.s32.f32 %v1076
        %v1267 = vcvt.s32.f32 %v1077
        %v1268 = vcvt.s32.f32 %v1078
        %v1269 = vcvt.s32.f32 %v1079
        %v1270 = vcvt.s32.f32 %v1080
        %v1271 = vcvt.s32.f32 %v1081
        %v1272 = vcvt.s32.f32 %v1082
        %v1273 = vcvt.s32.f32 %v1083
        %v1274 = vcvt.s32.f32 %v1084
        %v1275 = vcvt.s32.f32 %v1085
        %v1276 = vcvt.s32.f32 %v1086
        %v1277 = vcvt.s32.f32 %v1087
        %v1278 = vcvt.s32.f32 %v1088
        %v1279 = vcvt.s32.f32 %v1089
        %v1280 = vcvt.s32.f32 %v1090
        %v1281 = vcvt.s32.f32 %v1091
        %v1282 = vcvt.s32.f32 %v1092
        %v1283 = vcvt.s32.f32 %v1093
        %v1284 = vcvt.s32.f32 %v1094
        %v1285 = vcvt.s32.f32 %v1095
        %v1286 = vld [vmem:[#allocation7] sm:$0xff]
        %v1287 = vld [vmem:[#allocation7 + $0x8] sm:$0xff]
        %v1288 = vld [vmem:[#allocation7 + $0x10] sm:$0xff]
        %v1289 = vld [vmem:[#allocation7 + $0x18] sm:$0xff]
        %v1290 = vld [vmem:[#allocation7 + $0x20] sm:$0xff]
        %v1291 = vld [vmem:[#allocation7 + $0x28] sm:$0xff]
        %v1292 = vld [vmem:[#allocation7 + $0x30] sm:$0xff]
        %v1293 = vld [vmem:[#allocation7 + $0x38] sm:$0xff]
        %v1294 = vld [vmem:[#allocation7 + $0x40] sm:$0xff]
        %v1295 = vld [vmem:[#allocation7 + $0x48] sm:$0xff]
        %v1296 = vld [vmem:[#allocation7 + $0x50] sm:$0xff]
        %v1297 = vld [vmem:[#allocation7 + $0x58] sm:$0xff]
        %v1298 = vld [vmem:[#allocation7 + $0x60] sm:$0xff]
        %v1299 = vld [vmem:[#allocation7 + $0x68] sm:$0xff]
        %v1300 = vld [vmem:[#allocation7 + $0x70] sm:$0xff]
        %v1301 = vld [vmem:[#allocation7 + $0x78] sm:$0xff]
        %v1302 = vld [vmem:[#allocation7 + $0x80] sm:$0xff]
        %v1303 = vld [vmem:[#allocation7 + $0x88] sm:$0xff]
        %v1304 = vld [vmem:[#allocation7 + $0x90] sm:$0xff]
        %v1305 = vld [vmem:[#allocation7 + $0x98] sm:$0xff]
        %v1306 = vld [vmem:[#allocation7 + $0xa0] sm:$0x3f]
        %v1307 = vld [vmem:[#allocation7 + $0xa8] sm:$0x3f]
        %vm1308 = vcmask 588800
        %v1310 = vsel %vm1308, %v1287, 0
        %v1313 = vsel %vm1308, %v1289, 0
        %v1316 = vsel %vm1308, %v1291, 0
        %v1319 = vsel %vm1308, %v1293, 0
        %v1322 = vsel %vm1308, %v1295, 0
        %v1325 = vsel %vm1308, %v1297, 0
        %v1328 = vsel %vm1308, %v1299, 0
        %v1331 = vsel %vm1308, %v1301, 0
        %v1334 = vsel %vm1308, %v1303, 0
        %v1337 = vsel %vm1308, %v1305, 0
        %v1340 = vsel %vm1308, %v1307, 0
        %1342 = vmatpush.msra.mxu0 %v647
        %1343 = vmatpush.msra.mxu0 %v642
        %1344 = vmatpush.msra.mxu0 %v637
        %1345 = vmatpush.msra.mxu0 %v632
        %1346 = vmatpush.msra.mxu0 %v627
        %1347 = vmatpush.msra.mxu0 %v622
        %1348 = vmatpush.msra.mxu0 %v617
        %1349 = vmatpush.msra.mxu0 %v612
        %1350 = vmatpush.msra.mxu0 %v607
        %1351 = vmatpush.msra.mxu0 %v602
        %1352 = vmatpush.msra.mxu0 %v597
        %1353 = vmatpush.msra.mxu0 %v592
        %1354 = vmatpush.msra.mxu0 %v587
        %1355 = vmatpush.msra.mxu0 %v582
        %1356 = vmatpush.msra.mxu0 %v577
        %1357 = vmatpush.msra.mxu0 %v572
        %1358 = vmatmul.f32.gmra.mxu0 %v1286
        %v1359 = vpop.f32.mrf.mxu0
        %v1360 = vadd.f32 0.0, %v1359
        %1361 = vmatmul.f32.gmra.mxu0 %v1288
        %v1362 = vpop.f32.mrf.mxu0
        %v1363 = vadd.f32 0.0, %v1362
        %1364 = vmatmul.f32.gmra.mxu0 %v1290
        %v1365 = vpop.f32.mrf.mxu0
        %v1366 = vadd.f32 0.0, %v1365
        %1367 = vmatmul.f32.gmra.mxu0 %v1292
        %v1368 = vpop.f32.mrf.mxu0
        %v1369 = vadd.f32 0.0, %v1368
        %1370 = vmatmul.f32.gmra.mxu0 %v1294
        %v1371 = vpop.f32.mrf.mxu0
        %v1372 = vadd.f32 0.0, %v1371
        %1373 = vmatmul.f32.gmra.mxu0 %v1296
        %v1374 = vpop.f32.mrf.mxu0
        %v1375 = vadd.f32 0.0, %v1374
        %1376 = vmatmul.f32.gmra.mxu0 %v1298
        %v1377 = vpop.f32.mrf.mxu0
        %v1378 = vadd.f32 0.0, %v1377
        %1379 = vmatmul.f32.gmra.mxu0 %v1300
        %v1380 = vpop.f32.mrf.mxu0
        %v1381 = vadd.f32 0.0, %v1380
        %1382 = vmatmul.f32.gmra.mxu0 %v1302
        %v1383 = vpop.f32.mrf.mxu0
        %v1384 = vadd.f32 0.0, %v1383
        %1385 = vmatmul.f32.gmra.mxu0 %v1304
        %v1386 = vpop.f32.mrf.mxu0
        %v1387 = vadd.f32 0.0, %v1386
        %1388 = vmatmul.f32.gmra.mxu0 %v1306
        %v1389 = vpop.f32.mrf.mxu0
        %v1390 = vadd.f32 0.0, %v1389
        %1391 = vdwg.mxu0
        %1392 = vmatpush.msra.mxu0 0.0
        %1393 = vmatpush.msra.mxu0 0.0
        %1394 = vmatpush.msra.mxu0 0.0
        %1395 = vmatpush.msra.mxu0 0.0
        %1396 = vmatpush.msra.mxu0 0.0
        %1397 = vmatpush.msra.mxu0 0.0
        %1398 = vmatpush.msra.mxu0 0.0
        %1399 = vmatpush.msra.mxu0 %v692
        %1400 = vmatpush.msra.mxu0 %v687
        %1401 = vmatpush.msra.mxu0 %v682
        %1402 = vmatpush.msra.mxu0 %v677
        %1403 = vmatpush.msra.mxu0 %v672
        %1404 = vmatpush.msra.mxu0 %v667
        %1405 = vmatpush.msra.mxu0 %v662
        %1406 = vmatpush.msra.mxu0 %v657
        %1407 = vmatpush.msra.mxu0 %v652
        %1408 = vmatmul.f32.gmra.mxu0 %v1310
        %v1409 = vpop.f32.mrf.mxu0
        %v1410 = vadd.f32 %v1360, %v1409
        %1411 = vmatmul.f32.gmra.mxu0 %v1313
        %v1412 = vpop.f32.mrf.mxu0
        %v1413 = vadd.f32 %v1363, %v1412
        %1414 = vmatmul.f32.gmra.mxu0 %v1316
        %v1415 = vpop.f32.mrf.mxu0
        %v1416 = vadd.f32 %v1366, %v1415
        %1417 = vmatmul.f32.gmra.mxu0 %v1319
        %v1418 = vpop.f32.mrf.mxu0
        %v1419 = vadd.f32 %v1369, %v1418
        %1420 = vmatmul.f32.gmra.mxu0 %v1322
        %v1421 = vpop.f32.mrf.mxu0
        %v1422 = vadd.f32 %v1372, %v1421
        %1423 = vmatmul.f32.gmra.mxu0 %v1325
        %v1424 = vpop.f32.mrf.mxu0
        %v1425 = vadd.f32 %v1375, %v1424
        %1426 = vmatmul.f32.gmra.mxu0 %v1328
        %v1427 = vpop.f32.mrf.mxu0
        %v1428 = vadd.f32 %v1378, %v1427
        %1429 = vmatmul.f32.gmra.mxu0 %v1331
        %v1430 = vpop.f32.mrf.mxu0
        %v1431 = vadd.f32 %v1381, %v1430
        %1432 = vmatmul.f32.gmra.mxu0 %v1334
        %v1433 = vpop.f32.mrf.mxu0
        %v1434 = vadd.f32 %v1384, %v1433
        %1435 = vmatmul.f32.gmra.mxu0 %v1337
        %v1436 = vpop.f32.mrf.mxu0
        %v1437 = vadd.f32 %v1387, %v1436
        %1438 = vmatmul.f32.gmra.mxu0 %v1340
        %v1439 = vpop.f32.mrf.mxu0
        %v1440 = vadd.f32 %v1390, %v1439
        %1441 = vdwg.mxu0
        %1442 = vmatpush.msra.mxu0 %v648
        %1443 = vmatpush.msra.mxu0 %v643
        %1444 = vmatpush.msra.mxu0 %v638
        %1445 = vmatpush.msra.mxu0 %v633
        %1446 = vmatpush.msra.mxu0 %v628
        %1447 = vmatpush.msra.mxu0 %v623
        %1448 = vmatpush.msra.mxu0 %v618
        %1449 = vmatpush.msra.mxu0 %v613
        %1450 = vmatpush.msra.mxu0 %v608
        %1451 = vmatpush.msra.mxu0 %v603
        %1452 = vmatpush.msra.mxu0 %v598
        %1453 = vmatpush.msra.mxu0 %v593
        %1454 = vmatpush.msra.mxu0 %v588
        %1455 = vmatpush.msra.mxu0 %v583
        %1456 = vmatpush.msra.mxu0 %v578
        %1457 = vmatpush.msra.mxu0 %v573
        %1458 = vmatmul.f32.gmra.mxu0 %v1286
        %v1459 = vpop.f32.mrf.mxu0
        %v1460 = vadd.f32 0.0, %v1459
        %1461 = vmatmul.f32.gmra.mxu0 %v1288
        %v1462 = vpop.f32.mrf.mxu0
        %v1463 = vadd.f32 0.0, %v1462
        %1464 = vmatmul.f32.gmra.mxu0 %v1290
        %v1465 = vpop.f32.mrf.mxu0
        %v1466 = vadd.f32 0.0, %v1465
        %1467 = vmatmul.f32.gmra.mxu0 %v1292
        %v1468 = vpop.f32.mrf.mxu0
        %v1469 = vadd.f32 0.0, %v1468
        %1470 = vmatmul.f32.gmra.mxu0 %v1294
        %v1471 = vpop.f32.mrf.mxu0
        %v1472 = vadd.f32 0.0, %v1471
        %1473 = vmatmul.f32.gmra.mxu0 %v1296
        %v1474 = vpop.f32.mrf.mxu0
        %v1475 = vadd.f32 0.0, %v1474
        %1476 = vmatmul.f32.gmra.mxu0 %v1298
        %v1477 = vpop.f32.mrf.mxu0
        %v1478 = vadd.f32 0.0, %v1477
        %1479 = vmatmul.f32.gmra.mxu0 %v1300
        %v1480 = vpop.f32.mrf.mxu0
        %v1481 = vadd.f32 0.0, %v1480
        %1482 = vmatmul.f32.gmra.mxu0 %v1302
        %v1483 = vpop.f32.mrf.mxu0
        %v1484 = vadd.f32 0.0, %v1483
        %1485 = vmatmul.f32.gmra.mxu0 %v1304
        %v1486 = vpop.f32.mrf.mxu0
        %v1487 = vadd.f32 0.0, %v1486
        %1488 = vmatmul.f32.gmra.mxu0 %v1306
        %v1489 = vpop.f32.mrf.mxu0
        %v1490 = vadd.f32 0.0, %v1489
        %1491 = vdwg.mxu0
        %1492 = vmatpush.msra.mxu0 0.0
        %1493 = vmatpush.msra.mxu0 0.0
        %1494 = vmatpush.msra.mxu0 0.0
        %1495 = vmatpush.msra.mxu0 0.0
        %1496 = vmatpush.msra.mxu0 0.0
        %1497 = vmatpush.msra.mxu0 0.0
        %1498 = vmatpush.msra.mxu0 0.0
        %1499 = vmatpush.msra.mxu0 %v693
        %1500 = vmatpush.msra.mxu0 %v688
        %1501 = vmatpush.msra.mxu0 %v683
        %1502 = vmatpush.msra.mxu0 %v678
        %1503 = vmatpush.msra.mxu0 %v673
        %1504 = vmatpush.msra.mxu0 %v668
        %1505 = vmatpush.msra.mxu0 %v663
        %1506 = vmatpush.msra.mxu0 %v658
        %1507 = vmatpush.msra.mxu0 %v653
        %1508 = vmatmul.f32.gmra.mxu0 %v1310
        %v1509 = vpop.f32.mrf.mxu0
        %v1510 = vadd.f32 %v1460, %v1509
        %1511 = vmatmul.f32.gmra.mxu0 %v1313
        %v1512 = vpop.f32.mrf.mxu0
        %v1513 = vadd.f32 %v1463, %v1512
        %1514 = vmatmul.f32.gmra.mxu0 %v1316
        %v1515 = vpop.f32.mrf.mxu0
        %v1516 = vadd.f32 %v1466, %v1515
        %1517 = vmatmul.f32.gmra.mxu0 %v1319
        %v1518 = vpop.f32.mrf.mxu0
        %v1519 = vadd.f32 %v1469, %v1518
        %1520 = vmatmul.f32.gmra.mxu0 %v1322
        %v1521 = vpop.f32.mrf.mxu0
        %v1522 = vadd.f32 %v1472, %v1521
        %1523 = vmatmul.f32.gmra.mxu0 %v1325
        %v1524 = vpop.f32.mrf.mxu0
        %v1525 = vadd.f32 %v1475, %v1524
        %1526 = vmatmul.f32.gmra.mxu0 %v1328
        %v1527 = vpop.f32.mrf.mxu0
        %v1528 = vadd.f32 %v1478, %v1527
        %1529 = vmatmul.f32.gmra.mxu0 %v1331
        %v1530 = vpop.f32.mrf.mxu0
        %v1531 = vadd.f32 %v1481, %v1530
        %1532 = vmatmul.f32.gmra.mxu0 %v1334
        %v1533 = vpop.f32.mrf.mxu0
        %v1534 = vadd.f32 %v1484, %v1533
        %1535 = vmatmul.f32.gmra.mxu0 %v1337
        %v1536 = vpop.f32.mrf.mxu0
        %v1537 = vadd.f32 %v1487, %v1536
        %1538 = vmatmul.f32.gmra.mxu0 %v1340
        %v1539 = vpop.f32.mrf.mxu0
        %v1540 = vadd.f32 %v1490, %v1539
        %1541 = vdwg.mxu0
        %1542 = vmatpush.msra.mxu0 %v649
        %1543 = vmatpush.msra.mxu0 %v644
        %1544 = vmatpush.msra.mxu0 %v639
        %1545 = vmatpush.msra.mxu0 %v634
        %1546 = vmatpush.msra.mxu0 %v629
        %1547 = vmatpush.msra.mxu0 %v624
        %1548 = vmatpush.msra.mxu0 %v619
        %1549 = vmatpush.msra.mxu0 %v614
        %1550 = vmatpush.msra.mxu0 %v609
        %1551 = vmatpush.msra.mxu0 %v604
        %1552 = vmatpush.msra.mxu0 %v599
        %1553 = vmatpush.msra.mxu0 %v594
        %1554 = vmatpush.msra.mxu0 %v589
        %1555 = vmatpush.msra.mxu0 %v584
        %1556 = vmatpush.msra.mxu0 %v579
        %1557 = vmatpush.msra.mxu0 %v574
        %1558 = vmatmul.f32.gmra.mxu0 %v1286
        %v1559 = vpop.f32.mrf.mxu0
        %v1560 = vadd.f32 0.0, %v1559
        %1561 = vmatmul.f32.gmra.mxu0 %v1288
        %v1562 = vpop.f32.mrf.mxu0
        %v1563 = vadd.f32 0.0, %v1562
        %1564 = vmatmul.f32.gmra.mxu0 %v1290
        %v1565 = vpop.f32.mrf.mxu0
        %v1566 = vadd.f32 0.0, %v1565
        %1567 = vmatmul.f32.gmra.mxu0 %v1292
        %v1568 = vpop.f32.mrf.mxu0
        %v1569 = vadd.f32 0.0, %v1568
        %1570 = vmatmul.f32.gmra.mxu0 %v1294
        %v1571 = vpop.f32.mrf.mxu0
        %v1572 = vadd.f32 0.0, %v1571
        %1573 = vmatmul.f32.gmra.mxu0 %v1296
        %v1574 = vpop.f32.mrf.mxu0
        %v1575 = vadd.f32 0.0, %v1574
        %1576 = vmatmul.f32.gmra.mxu0 %v1298
        %v1577 = vpop.f32.mrf.mxu0
        %v1578 = vadd.f32 0.0, %v1577
        %1579 = vmatmul.f32.gmra.mxu0 %v1300
        %v1580 = vpop.f32.mrf.mxu0
        %v1581 = vadd.f32 0.0, %v1580
        %1582 = vmatmul.f32.gmra.mxu0 %v1302
        %v1583 = vpop.f32.mrf.mxu0
        %v1584 = vadd.f32 0.0, %v1583
        %1585 = vmatmul.f32.gmra.mxu0 %v1304
        %v1586 = vpop.f32.mrf.mxu0
        %v1587 = vadd.f32 0.0, %v1586
        %1588 = vmatmul.f32.gmra.mxu0 %v1306
        %v1589 = vpop.f32.mrf.mxu0
        %v1590 = vadd.f32 0.0, %v1589
        %1591 = vdwg.mxu0
        %1592 = vmatpush.msra.mxu0 0.0
        %1593 = vmatpush.msra.mxu0 0.0
        %1594 = vmatpush.msra.mxu0 0.0
        %1595 = vmatpush.msra.mxu0 0.0
        %1596 = vmatpush.msra.mxu0 0.0
        %1597 = vmatpush.msra.mxu0 0.0
        %1598 = vmatpush.msra.mxu0 0.0
        %1599 = vmatpush.msra.mxu0 %v694
        %1600 = vmatpush.msra.mxu0 %v689
        %1601 = vmatpush.msra.mxu0 %v684
        %1602 = vmatpush.msra.mxu0 %v679
        %1603 = vmatpush.msra.mxu0 %v674
        %1604 = vmatpush.msra.mxu0 %v669
        %1605 = vmatpush.msra.mxu0 %v664
        %1606 = vmatpush.msra.mxu0 %v659
        %1607 = vmatpush.msra.mxu0 %v654
        %1608 = vmatmul.f32.gmra.mxu0 %v1310
        %v1609 = vpop.f32.mrf.mxu0
        %v1610 = vadd.f32 %v1560, %v1609
        %1611 = vmatmul.f32.gmra.mxu0 %v1313
        %v1612 = vpop.f32.mrf.mxu0
        %v1613 = vadd.f32 %v1563, %v1612
        %1614 = vmatmul.f32.gmra.mxu0 %v1316
        %v1615 = vpop.f32.mrf.mxu0
        %v1616 = vadd.f32 %v1566, %v1615
        %1617 = vmatmul.f32.gmra.mxu0 %v1319
        %v1618 = vpop.f32.mrf.mxu0
        %v1619 = vadd.f32 %v1569, %v1618
        %1620 = vmatmul.f32.gmra.mxu0 %v1322
        %v1621 = vpop.f32.mrf.mxu0
        %v1622 = vadd.f32 %v1572, %v1621
        %1623 = vmatmul.f32.gmra.mxu0 %v1325
        %v1624 = vpop.f32.mrf.mxu0
        %v1625 = vadd.f32 %v1575, %v1624
        %1626 = vmatmul.f32.gmra.mxu0 %v1328
        %v1627 = vpop.f32.mrf.mxu0
        %v1628 = vadd.f32 %v1578, %v1627
        %1629 = vmatmul.f32.gmra.mxu0 %v1331
        %v1630 = vpop.f32.mrf.mxu0
        %v1631 = vadd.f32 %v1581, %v1630
        %1632 = vmatmul.f32.gmra.mxu0 %v1334
        %v1633 = vpop.f32.mrf.mxu0
        %v1634 = vadd.f32 %v1584, %v1633
        %1635 = vmatmul.f32.gmra.mxu0 %v1337
        %v1636 = vpop.f32.mrf.mxu0
        %v1637 = vadd.f32 %v1587, %v1636
        %1638 = vmatmul.f32.gmra.mxu0 %v1340
        %v1639 = vpop.f32.mrf.mxu0
        %v1640 = vadd.f32 %v1590, %v1639
        %1641 = vdwg.mxu0
        %1642 = vmatpush.msra.mxu0 %v650
        %1643 = vmatpush.msra.mxu0 %v645
        %1644 = vmatpush.msra.mxu0 %v640
        %1645 = vmatpush.msra.mxu0 %v635
        %1646 = vmatpush.msra.mxu0 %v630
        %1647 = vmatpush.msra.mxu0 %v625
        %1648 = vmatpush.msra.mxu0 %v620
        %1649 = vmatpush.msra.mxu0 %v615
        %1650 = vmatpush.msra.mxu0 %v610
        %1651 = vmatpush.msra.mxu0 %v605
        %1652 = vmatpush.msra.mxu0 %v600
        %1653 = vmatpush.msra.mxu0 %v595
        %1654 = vmatpush.msra.mxu0 %v590
        %1655 = vmatpush.msra.mxu0 %v585
        %1656 = vmatpush.msra.mxu0 %v580
        %1657 = vmatpush.msra.mxu0 %v575
        %1658 = vmatmul.f32.gmra.mxu0 %v1286
        %v1659 = vpop.f32.mrf.mxu0
        %v1660 = vadd.f32 0.0, %v1659
        %1661 = vmatmul.f32.gmra.mxu0 %v1288
        %v1662 = vpop.f32.mrf.mxu0
        %v1663 = vadd.f32 0.0, %v1662
        %1664 = vmatmul.f32.gmra.mxu0 %v1290
        %v1665 = vpop.f32.mrf.mxu0
        %v1666 = vadd.f32 0.0, %v1665
        %1667 = vmatmul.f32.gmra.mxu0 %v1292
        %v1668 = vpop.f32.mrf.mxu0
        %v1669 = vadd.f32 0.0, %v1668
        %1670 = vmatmul.f32.gmra.mxu0 %v1294
        %v1671 = vpop.f32.mrf.mxu0
        %v1672 = vadd.f32 0.0, %v1671
        %1673 = vmatmul.f32.gmra.mxu0 %v1296
        %v1674 = vpop.f32.mrf.mxu0
        %v1675 = vadd.f32 0.0, %v1674
        %1676 = vmatmul.f32.gmra.mxu0 %v1298
        %v1677 = vpop.f32.mrf.mxu0
        %v1678 = vadd.f32 0.0, %v1677
        %1679 = vmatmul.f32.gmra.mxu0 %v1300
        %v1680 = vpop.f32.mrf.mxu0
        %v1681 = vadd.f32 0.0, %v1680
        %1682 = vmatmul.f32.gmra.mxu0 %v1302
        %v1683 = vpop.f32.mrf.mxu0
        %v1684 = vadd.f32 0.0, %v1683
        %1685 = vmatmul.f32.gmra.mxu0 %v1304
        %v1686 = vpop.f32.mrf.mxu0
        %v1687 = vadd.f32 0.0, %v1686
        %1688 = vmatmul.f32.gmra.mxu0 %v1306
        %v1689 = vpop.f32.mrf.mxu0
        %v1690 = vadd.f32 0.0, %v1689
        %1691 = vdwg.mxu0
        %1692 = vmatpush.msra.mxu0 0.0
        %1693 = vmatpush.msra.mxu0 0.0
        %1694 = vmatpush.msra.mxu0 0.0
        %1695 = vmatpush.msra.mxu0 0.0
        %1696 = vmatpush.msra.mxu0 0.0
        %1697 = vmatpush.msra.mxu0 0.0
        %1698 = vmatpush.msra.mxu0 0.0
        %1699 = vmatpush.msra.mxu0 %v695
        %1700 = vmatpush.msra.mxu0 %v690
        %1701 = vmatpush.msra.mxu0 %v685
        %1702 = vmatpush.msra.mxu0 %v680
        %1703 = vmatpush.msra.mxu0 %v675
        %1704 = vmatpush.msra.mxu0 %v670
        %1705 = vmatpush.msra.mxu0 %v665
        %1706 = vmatpush.msra.mxu0 %v660
        %1707 = vmatpush.msra.mxu0 %v655
        %1708 = vmatmul.f32.gmra.mxu0 %v1310
        %v1709 = vpop.f32.mrf.mxu0
        %v1710 = vadd.f32 %v1660, %v1709
        %1711 = vmatmul.f32.gmra.mxu0 %v1313
        %v1712 = vpop.f32.mrf.mxu0
        %v1713 = vadd.f32 %v1663, %v1712
        %1714 = vmatmul.f32.gmra.mxu0 %v1316
        %v1715 = vpop.f32.mrf.mxu0
        %v1716 = vadd.f32 %v1666, %v1715
        %1717 = vmatmul.f32.gmra.mxu0 %v1319
        %v1718 = vpop.f32.mrf.mxu0
        %v1719 = vadd.f32 %v1669, %v1718
        %1720 = vmatmul.f32.gmra.mxu0 %v1322
        %v1721 = vpop.f32.mrf.mxu0
        %v1722 = vadd.f32 %v1672, %v1721
        %1723 = vmatmul.f32.gmra.mxu0 %v1325
        %v1724 = vpop.f32.mrf.mxu0
        %v1725 = vadd.f32 %v1675, %v1724
        %1726 = vmatmul.f32.gmra.mxu0 %v1328
        %v1727 = vpop.f32.mrf.mxu0
        %v1728 = vadd.f32 %v1678, %v1727
        %1729 = vmatmul.f32.gmra.mxu0 %v1331
        %v1730 = vpop.f32.mrf.mxu0
        %v1731 = vadd.f32 %v1681, %v1730
        %1732 = vmatmul.f32.gmra.mxu0 %v1334
        %v1733 = vpop.f32.mrf.mxu0
        %v1734 = vadd.f32 %v1684, %v1733
        %1735 = vmatmul.f32.gmra.mxu0 %v1337
        %v1736 = vpop.f32.mrf.mxu0
        %v1737 = vadd.f32 %v1687, %v1736
        %1738 = vmatmul.f32.gmra.mxu0 %v1340
        %v1739 = vpop.f32.mrf.mxu0
        %v1740 = vadd.f32 %v1690, %v1739
        %1741 = vdwg.mxu0
        %1742 = vmatpush.msra.mxu0 %v651
        %1743 = vmatpush.msra.mxu0 %v646
        %1744 = vmatpush.msra.mxu0 %v641
        %1745 = vmatpush.msra.mxu0 %v636
        %1746 = vmatpush.msra.mxu0 %v631
        %1747 = vmatpush.msra.mxu0 %v626
        %1748 = vmatpush.msra.mxu0 %v621
        %1749 = vmatpush.msra.mxu0 %v616
        %1750 = vmatpush.msra.mxu0 %v611
        %1751 = vmatpush.msra.mxu0 %v606
        %1752 = vmatpush.msra.mxu0 %v601
        %1753 = vmatpush.msra.mxu0 %v596
        %1754 = vmatpush.msra.mxu0 %v591
        %1755 = vmatpush.msra.mxu0 %v586
        %1756 = vmatpush.msra.mxu0 %v581
        %1757 = vmatpush.msra.mxu0 %v576
        %1758 = vmatmul.f32.gmra.mxu0 %v1286
        %v1759 = vpop.f32.mrf.mxu0
        %v1760 = vadd.f32 0.0, %v1759
        %1761 = vmatmul.f32.gmra.mxu0 %v1288
        %v1762 = vpop.f32.mrf.mxu0
        %v1763 = vadd.f32 0.0, %v1762
        %1764 = vmatmul.f32.gmra.mxu0 %v1290
        %v1765 = vpop.f32.mrf.mxu0
        %v1766 = vadd.f32 0.0, %v1765
        %1767 = vmatmul.f32.gmra.mxu0 %v1292
        %v1768 = vpop.f32.mrf.mxu0
        %v1769 = vadd.f32 0.0, %v1768
        %1770 = vmatmul.f32.gmra.mxu0 %v1294
        %v1771 = vpop.f32.mrf.mxu0
        %v1772 = vadd.f32 0.0, %v1771
        %1773 = vmatmul.f32.gmra.mxu0 %v1296
        %v1774 = vpop.f32.mrf.mxu0
        %v1775 = vadd.f32 0.0, %v1774
        %1776 = vmatmul.f32.gmra.mxu0 %v1298
        %v1777 = vpop.f32.mrf.mxu0
        %v1778 = vadd.f32 0.0, %v1777
        %1779 = vmatmul.f32.gmra.mxu0 %v1300
        %v1780 = vpop.f32.mrf.mxu0
        %v1781 = vadd.f32 0.0, %v1780
        %1782 = vmatmul.f32.gmra.mxu0 %v1302
        %v1783 = vpop.f32.mrf.mxu0
        %v1784 = vadd.f32 0.0, %v1783
        %1785 = vmatmul.f32.gmra.mxu0 %v1304
        %v1786 = vpop.f32.mrf.mxu0
        %v1787 = vadd.f32 0.0, %v1786
        %1788 = vmatmul.f32.gmra.mxu0 %v1306
        %v1789 = vpop.f32.mrf.mxu0
        %v1790 = vadd.f32 0.0, %v1789
        %1791 = vdwg.mxu0
        %1792 = vmatpush.msra.mxu0 0.0
        %1793 = vmatpush.msra.mxu0 0.0
        %1794 = vmatpush.msra.mxu0 0.0
        %1795 = vmatpush.msra.mxu0 0.0
        %1796 = vmatpush.msra.mxu0 0.0
        %1797 = vmatpush.msra.mxu0 0.0
        %1798 = vmatpush.msra.mxu0 0.0
        %1799 = vmatpush.msra.mxu0 %v696
        %1800 = vmatpush.msra.mxu0 %v691
        %1801 = vmatpush.msra.mxu0 %v686
        %1802 = vmatpush.msra.mxu0 %v681
        %1803 = vmatpush.msra.mxu0 %v676
        %1804 = vmatpush.msra.mxu0 %v671
        %1805 = vmatpush.msra.mxu0 %v666
        %1806 = vmatpush.msra.mxu0 %v661
        %1807 = vmatpush.msra.mxu0 %v656
        %1808 = vmatmul.f32.gmra.mxu0 %v1310
        %v1809 = vpop.f32.mrf.mxu0
        %v1810 = vadd.f32 %v1760, %v1809
        %1811 = vmatmul.f32.gmra.mxu0 %v1313
        %v1812 = vpop.f32.mrf.mxu0
        %v1813 = vadd.f32 %v1763, %v1812
        %1814 = vmatmul.f32.gmra.mxu0 %v1316
        %v1815 = vpop.f32.mrf.mxu0
        %v1816 = vadd.f32 %v1766, %v1815
        %1817 = vmatmul.f32.gmra.mxu0 %v1319
        %v1818 = vpop.f32.mrf.mxu0
        %v1819 = vadd.f32 %v1769, %v1818
        %1820 = vmatmul.f32.gmra.mxu0 %v1322
        %v1821 = vpop.f32.mrf.mxu0
        %v1822 = vadd.f32 %v1772, %v1821
        %1823 = vmatmul.f32.gmra.mxu0 %v1325
        %v1824 = vpop.f32.mrf.mxu0
        %v1825 = vadd.f32 %v1775, %v1824
        %1826 = vmatmul.f32.gmra.mxu0 %v1328
        %v1827 = vpop.f32.mrf.mxu0
        %v1828 = vadd.f32 %v1778, %v1827
        %1829 = vmatmul.f32.gmra.mxu0 %v1331
        %v1830 = vpop.f32.mrf.mxu0
        %v1831 = vadd.f32 %v1781, %v1830
        %1832 = vmatmul.f32.gmra.mxu0 %v1334
        %v1833 = vpop.f32.mrf.mxu0
        %v1834 = vadd.f32 %v1784, %v1833
        %1835 = vmatmul.f32.gmra.mxu0 %v1337
        %v1836 = vpop.f32.mrf.mxu0
        %v1837 = vadd.f32 %v1787, %v1836
        %1838 = vmatmul.f32.gmra.mxu0 %v1340
        %v1839 = vpop.f32.mrf.mxu0
        %v1840 = vadd.f32 %v1790, %v1839
        %1841 = vdwg.mxu0
        %v1842 = vld [vmem:[#allocation8] sm:$0xff]
        %v1843 = vld [vmem:[#allocation8 + $0x8] sm:$0xff]
        %v1844 = vld [vmem:[#allocation8 + $0x10] sm:$0xff]
        %v1845 = vld [vmem:[#allocation8 + $0x18] sm:$0xff]
        %v1846 = vld [vmem:[#allocation8 + $0x20] sm:$0xff]
        %v1847 = vld [vmem:[#allocation8 + $0x28] sm:$0xff]
        %v1848 = vld [vmem:[#allocation8 + $0x30] sm:$0xff]
        %v1849 = vld [vmem:[#allocation8 + $0x38] sm:$0xff]
        %v1850 = vld [vmem:[#allocation8 + $0x40] sm:$0xff]
        %v1851 = vld [vmem:[#allocation8 + $0x48] sm:$0xff]
        %v1852 = vld [vmem:[#allocation8 + $0x50] sm:$0xff]
        %v1853 = vld [vmem:[#allocation8 + $0x58] sm:$0xff]
        %v1854 = vld [vmem:[#allocation8 + $0x60] sm:$0xff]
        %v1855 = vld [vmem:[#allocation8 + $0x68] sm:$0xff]
        %v1856 = vld [vmem:[#allocation8 + $0x70] sm:$0xff]
        %v1857 = vld [vmem:[#allocation8 + $0x78] sm:$0xff]
        %v1858 = vld [vmem:[#allocation8 + $0x80] sm:$0xff]
        %v1859 = vld [vmem:[#allocation8 + $0x88] sm:$0xff]
        %v1860 = vld [vmem:[#allocation8 + $0x90] sm:$0xff]
        %v1861 = vld [vmem:[#allocation8 + $0x98] sm:$0xff]
        %v1862 = vld [vmem:[#allocation8 + $0xa0] sm:$0xff]
        %v1863 = vld [vmem:[#allocation8 + $0xa8] sm:$0xff]
        %v1864 = vld [vmem:[#allocation8 + $0xb0] sm:$0xff]
        %v1865 = vld [vmem:[#allocation8 + $0xb8] sm:$0xff]
        %v1866 = vld [vmem:[#allocation8 + $0xc0] sm:$0xff]
        %v1867 = vld [vmem:[#allocation8 + $0xc8] sm:$0xff]
        %v1868 = vld [vmem:[#allocation8 + $0xd0] sm:$0xff]
        %v1869 = vld [vmem:[#allocation8 + $0xd8] sm:$0xff]
        %v1870 = vld [vmem:[#allocation8 + $0xe0] sm:$0xff]
        %v1871 = vld [vmem:[#allocation8 + $0xe8] sm:$0xff]
        %v1872 = vld [vmem:[#allocation8 + $0xf0] sm:$0x3f]
        %v1873 = vld [vmem:[#allocation8 + $0xf8] sm:$0x3f]
        %v1874 = vld [vmem:[#allocation8 + $0x100] sm:$0x3f]
        %vm1875 = vcmask 359424
        %v1877 = vsel %vm1875, %v1844, 0
        %v1880 = vsel %vm1875, %v1847, 0
        %v1883 = vsel %vm1875, %v1850, 0
        %v1886 = vsel %vm1875, %v1853, 0
        %v1889 = vsel %vm1875, %v1856, 0
        %v1892 = vsel %vm1875, %v1859, 0
        %v1895 = vsel %vm1875, %v1862, 0
        %v1898 = vsel %vm1875, %v1865, 0
        %v1901 = vsel %vm1875, %v1868, 0
        %v1904 = vsel %vm1875, %v1871, 0
        %v1907 = vsel %vm1875, %v1874, 0
        %vm1909 = vcmask 1043456
        %v1911 = vsel %vm1909, %v1281, 0
        %v1914 = vsel %vm1909, %v1282, 0
        %v1917 = vsel %vm1909, %v1283, 0
        %v1920 = vsel %vm1909, %v1284, 0
        %v1923 = vsel %vm1909, %v1285, 0
        %1925 = vmatpush.msra.mxu0 %v1171
        %1926 = vmatpush.msra.mxu0 %v1166
        %1927 = vmatpush.msra.mxu0 %v1161
        %1928 = vmatpush.msra.mxu0 %v1156
        %1929 = vmatpush.msra.mxu0 %v1151
        %1930 = vmatpush.msra.mxu0 %v1146
        %1931 = vmatpush.msra.mxu0 %v1141
        %1932 = vmatpush.msra.mxu0 %v1136
        %1933 = vmatpush.msra.mxu0 %v1131
        %1934 = vmatpush.msra.mxu0 %v1126
        %1935 = vmatpush.msra.mxu0 %v1121
        %1936 = vmatpush.msra.mxu0 %v1116
        %1937 = vmatpush.msra.mxu0 %v1111
        %1938 = vmatpush.msra.mxu0 %v1106
        %1939 = vmatpush.msra.mxu0 %v1101
        %1940 = vmatpush.msra.mxu0 %v1096
        %1941 = vmatmul.f32.gmra.mxu0 %v1842
        %v1942 = vpop.f32.mrf.mxu0
        %v1943 = vadd.f32 0.0, %v1942
        %1944 = vmatmul.f32.gmra.mxu0 %v1845
        %v1945 = vpop.f32.mrf.mxu0
        %v1946 = vadd.f32 0.0, %v1945
        %1947 = vmatmul.f32.gmra.mxu0 %v1848
        %v1948 = vpop.f32.mrf.mxu0
        %v1949 = vadd.f32 0.0, %v1948
        %1950 = vmatmul.f32.gmra.mxu0 %v1851
        %v1951 = vpop.f32.mrf.mxu0
        %v1952 = vadd.f32 0.0, %v1951
        %1953 = vmatmul.f32.gmra.mxu0 %v1854
        %v1954 = vpop.f32.mrf.mxu0
        %v1955 = vadd.f32 0.0, %v1954
        %1956 = vmatmul.f32.gmra.mxu0 %v1857
        %v1957 = vpop.f32.mrf.mxu0
        %v1958 = vadd.f32 0.0, %v1957
        %1959 = vmatmul.f32.gmra.mxu0 %v1860
        %v1960 = vpop.f32.mrf.mxu0
        %v1961 = vadd.f32 0.0, %v1960
        %1962 = vmatmul.f32.gmra.mxu0 %v1863
        %v1963 = vpop.f32.mrf.mxu0
        %v1964 = vadd.f32 0.0, %v1963
        %1965 = vmatmul.f32.gmra.mxu0 %v1866
        %v1966 = vpop.f32.mrf.mxu0
        %v1967 = vadd.f32 0.0, %v1966
        %1968 = vmatmul.f32.gmra.mxu0 %v1869
        %v1969 = vpop.f32.mrf.mxu0
        %v1970 = vadd.f32 0.0, %v1969
        %1971 = vmatmul.f32.gmra.mxu0 %v1872
        %v1972 = vpop.f32.mrf.mxu0
        %v1973 = vadd.f32 0.0, %v1972
        %1974 = vdwg.mxu0
        %1975 = vmatpush.msra.mxu0 %v1251
        %1976 = vmatpush.msra.mxu0 %v1246
        %1977 = vmatpush.msra.mxu0 %v1241
        %1978 = vmatpush.msra.mxu0 %v1236
        %1979 = vmatpush.msra.mxu0 %v1231
        %1980 = vmatpush.msra.mxu0 %v1226
        %1981 = vmatpush.msra.mxu0 %v1221
        %1982 = vmatpush.msra.mxu0 %v1216
        %1983 = vmatpush.msra.mxu0 %v1211
        %1984 = vmatpush.msra.mxu0 %v1206
        %1985 = vmatpush.msra.mxu0 %v1201
        %1986 = vmatpush.msra.mxu0 %v1196
        %1987 = vmatpush.msra.mxu0 %v1191
        %1988 = vmatpush.msra.mxu0 %v1186
        %1989 = vmatpush.msra.mxu0 %v1181
        %1990 = vmatpush.msra.mxu0 %v1176
        %1991 = vmatmul.f32.gmra.mxu0 %v1843
        %v1992 = vpop.f32.mrf.mxu0
        %v1993 = vadd.f32 %v1943, %v1992
        %1994 = vmatmul.f32.gmra.mxu0 %v1846
        %v1995 = vpop.f32.mrf.mxu0
        %v1996 = vadd.f32 %v1946, %v1995
        %1997 = vmatmul.f32.gmra.mxu0 %v1849
        %v1998 = vpop.f32.mrf.mxu0
        %v1999 = vadd.f32 %v1949, %v1998
        %2000 = vmatmul.f32.gmra.mxu0 %v1852
        %v2001 = vpop.f32.mrf.mxu0
        %v2002 = vadd.f32 %v1952, %v2001
        %2003 = vmatmul.f32.gmra.mxu0 %v1855
        %v2004 = vpop.f32.mrf.mxu0
        %v2005 = vadd.f32 %v1955, %v2004
        %2006 = vmatmul.f32.gmra.mxu0 %v1858
        %v2007 = vpop.f32.mrf.mxu0
        %v2008 = vadd.f32 %v1958, %v2007
        %2009 = vmatmul.f32.gmra.mxu0 %v1861
        %v2010 = vpop.f32.mrf.mxu0
        %v2011 = vadd.f32 %v1961, %v2010
        %2012 = vmatmul.f32.gmra.mxu0 %v1864
        %v2013 = vpop.f32.mrf.mxu0
        %v2014 = vadd.f32 %v1964, %v2013
        %2015 = vmatmul.f32.gmra.mxu0 %v1867
        %v2016 = vpop.f32.mrf.mxu0
        %v2017 = vadd.f32 %v1967, %v2016
        %2018 = vmatmul.f32.gmra.mxu0 %v1870
        %v2019 = vpop.f32.mrf.mxu0
        %v2020 = vadd.f32 %v1970, %v2019
        %2021 = vmatmul.f32.gmra.mxu0 %v1873
        %v2022 = vpop.f32.mrf.mxu0
        %v2023 = vadd.f32 %v1973, %v2022
        %2024 = vdwg.mxu0
        %2025 = vmatpush.msra.mxu0 0.0
        %2026 = vmatpush.msra.mxu0 0.0
        %2027 = vmatpush.msra.mxu0 0.0
        %2028 = vmatpush.msra.mxu0 0.0
        %2029 = vmatpush.msra.mxu0 0.0
        %2030 = vmatpush.msra.mxu0 0.0
        %2031 = vmatpush.msra.mxu0 0.0
        %2032 = vmatpush.msra.mxu0 0.0
        %2033 = vmatpush.msra.mxu0 0.0
        %2034 = vmatpush.msra.mxu0 0.0
        %2035 = vmatpush.msra.mxu0 %v1911
        %2036 = vmatpush.msra.mxu0 %v1276
        %2037 = vmatpush.msra.mxu0 %v1271
        %2038 = vmatpush.msra.mxu0 %v1266
        %2039 = vmatpush.msra.mxu0 %v1261
        %2040 = vmatpush.msra.mxu0 %v1256
        %2041 = vmatmul.f32.gmra.mxu0 %v1877
        %v2042 = vpop.f32.mrf.mxu0
        %v2043 = vadd.f32 %v1993, %v2042
        %2044 = vmatmul.f32.gmra.mxu0 %v1880
        %v2045 = vpop.f32.mrf.mxu0
        %v2046 = vadd.f32 %v1996, %v2045
        %2047 = vmatmul.f32.gmra.mxu0 %v1883
        %v2048 = vpop.f32.mrf.mxu0
        %v2049 = vadd.f32 %v1999, %v2048
        %2050 = vmatmul.f32.gmra.mxu0 %v1886
        %v2051 = vpop.f32.mrf.mxu0
        %v2052 = vadd.f32 %v2002, %v2051
        %2053 = vmatmul.f32.gmra.mxu0 %v1889
        %v2054 = vpop.f32.mrf.mxu0
        %v2055 = vadd.f32 %v2005, %v2054
        %2056 = vmatmul.f32.gmra.mxu0 %v1892
        %v2057 = vpop.f32.mrf.mxu0
        %v2058 = vadd.f32 %v2008, %v2057
        %2059 = vmatmul.f32.gmra.mxu0 %v1895
        %v2060 = vpop.f32.mrf.mxu0
        %v2061 = vadd.f32 %v2011, %v2060
        %2062 = vmatmul.f32.gmra.mxu0 %v1898
        %v2063 = vpop.f32.mrf.mxu0
        %v2064 = vadd.f32 %v2014, %v2063
        %2065 = vmatmul.f32.gmra.mxu0 %v1901
        %v2066 = vpop.f32.mrf.mxu0
        %v2067 = vadd.f32 %v2017, %v2066
        %2068 = vmatmul.f32.gmra.mxu0 %v1904
        %v2069 = vpop.f32.mrf.mxu0
        %v2070 = vadd.f32 %v2020, %v2069
        %2071 = vmatmul.f32.gmra.mxu0 %v1907
        %v2072 = vpop.f32.mrf.mxu0
        %v2073 = vadd.f32 %v2023, %v2072
        %2074 = vdwg.mxu0
        %2075 = vmatpush.msra.mxu0 %v1172
        %2076 = vmatpush.msra.mxu0 %v1167
        %2077 = vmatpush.msra.mxu0 %v1162
        %2078 = vmatpush.msra.mxu0 %v1157
        %2079 = vmatpush.msra.mxu0 %v1152
        %2080 = vmatpush.msra.mxu0 %v1147
        %2081 = vmatpush.msra.mxu0 %v1142
        %2082 = vmatpush.msra.mxu0 %v1137
        %2083 = vmatpush.msra.mxu0 %v1132
        %2084 = vmatpush.msra.mxu0 %v1127
        %2085 = vmatpush.msra.mxu0 %v1122
        %2086 = vmatpush.msra.mxu0 %v1117
        %2087 = vmatpush.msra.mxu0 %v1112
        %2088 = vmatpush.msra.mxu0 %v1107
        %2089 = vmatpush.msra.mxu0 %v1102
        %2090 = vmatpush.msra.mxu0 %v1097
        %2091 = vmatmul.f32.gmra.mxu0 %v1842
        %v2092 = vpop.f32.mrf.mxu0
        %v2093 = vadd.f32 0.0, %v2092
        %2094 = vmatmul.f32.gmra.mxu0 %v1845
        %v2095 = vpop.f32.mrf.mxu0
        %v2096 = vadd.f32 0.0, %v2095
        %2097 = vmatmul.f32.gmra.mxu0 %v1848
        %v2098 = vpop.f32.mrf.mxu0
        %v2099 = vadd.f32 0.0, %v2098
        %2100 = vmatmul.f32.gmra.mxu0 %v1851
        %v2101 = vpop.f32.mrf.mxu0
        %v2102 = vadd.f32 0.0, %v2101
        %2103 = vmatmul.f32.gmra.mxu0 %v1854
        %v2104 = vpop.f32.mrf.mxu0
        %v2105 = vadd.f32 0.0, %v2104
        %2106 = vmatmul.f32.gmra.mxu0 %v1857
        %v2107 = vpop.f32.mrf.mxu0
        %v2108 = vadd.f32 0.0, %v2107
        %2109 = vmatmul.f32.gmra.mxu0 %v1860
        %v2110 = vpop.f32.mrf.mxu0
        %v2111 = vadd.f32 0.0, %v2110
        %2112 = vmatmul.f32.gmra.mxu0 %v1863
        %v2113 = vpop.f32.mrf.mxu0
        %v2114 = vadd.f32 0.0, %v2113
        %2115 = vmatmul.f32.gmra.mxu0 %v1866
        %v2116 = vpop.f32.mrf.mxu0
        %v2117 = vadd.f32 0.0, %v2116
        %2118 = vmatmul.f32.gmra.mxu0 %v1869
        %v2119 = vpop.f32.mrf.mxu0
        %v2120 = vadd.f32 0.0, %v2119
        %2121 = vmatmul.f32.gmra.mxu0 %v1872
        %v2122 = vpop.f32.mrf.mxu0
        %v2123 = vadd.f32 0.0, %v2122
        %2124 = vdwg.mxu0
        %2125 = vmatpush.msra.mxu0 %v1252
        %2126 = vmatpush.msra.mxu0 %v1247
        %2127 = vmatpush.msra.mxu0 %v1242
        %2128 = vmatpush.msra.mxu0 %v1237
        %2129 = vmatpush.msra.mxu0 %v1232
        %2130 = vmatpush.msra.mxu0 %v1227
        %2131 = vmatpush.msra.mxu0 %v1222
        %2132 = vmatpush.msra.mxu0 %v1217
        %2133 = vmatpush.msra.mxu0 %v1212
        %2134 = vmatpush.msra.mxu0 %v1207
        %2135 = vmatpush.msra.mxu0 %v1202
        %2136 = vmatpush.msra.mxu0 %v1197
        %2137 = vmatpush.msra.mxu0 %v1192
        %2138 = vmatpush.msra.mxu0 %v1187
        %2139 = vmatpush.msra.mxu0 %v1182
        %2140 = vmatpush.msra.mxu0 %v1177
        %2141 = vmatmul.f32.gmra.mxu0 %v1843
        %v2142 = vpop.f32.mrf.mxu0
        %v2143 = vadd.f32 %v2093, %v2142
        %2144 = vmatmul.f32.gmra.mxu0 %v1846
        %v2145 = vpop.f32.mrf.mxu0
        %v2146 = vadd.f32 %v2096, %v2145
        %2147 = vmatmul.f32.gmra.mxu0 %v1849
        %v2148 = vpop.f32.mrf.mxu0
        %v2149 = vadd.f32 %v2099, %v2148
        %2150 = vmatmul.f32.gmra.mxu0 %v1852
        %v2151 = vpop.f32.mrf.mxu0
        %v2152 = vadd.f32 %v2102, %v2151
        %2153 = vmatmul.f32.gmra.mxu0 %v1855
        %v2154 = vpop.f32.mrf.mxu0
        %v2155 = vadd.f32 %v2105, %v2154
        %2156 = vmatmul.f32.gmra.mxu0 %v1858
        %v2157 = vpop.f32.mrf.mxu0
        %v2158 = vadd.f32 %v2108, %v2157
        %2159 = vmatmul.f32.gmra.mxu0 %v1861
        %v2160 = vpop.f32.mrf.mxu0
        %v2161 = vadd.f32 %v2111, %v2160
        %2162 = vmatmul.f32.gmra.mxu0 %v1864
        %v2163 = vpop.f32.mrf.mxu0
        %v2164 = vadd.f32 %v2114, %v2163
        %2165 = vmatmul.f32.gmra.mxu0 %v1867
        %v2166 = vpop.f32.mrf.mxu0
        %v2167 = vadd.f32 %v2117, %v2166
        %2168 = vmatmul.f32.gmra.mxu0 %v1870
        %v2169 = vpop.f32.mrf.mxu0
        %v2170 = vadd.f32 %v2120, %v2169
        %2171 = vmatmul.f32.gmra.mxu0 %v1873
        %v2172 = vpop.f32.mrf.mxu0
        %v2173 = vadd.f32 %v2123, %v2172
        %2174 = vdwg.mxu0
        %2175 = vmatpush.msra.mxu0 0.0
        %2176 = vmatpush.msra.mxu0 0.0
        %2177 = vmatpush.msra.mxu0 0.0
        %2178 = vmatpush.msra.mxu0 0.0
        %2179 = vmatpush.msra.mxu0 0.0
        %2180 = vmatpush.msra.mxu0 0.0
        %2181 = vmatpush.msra.mxu0 0.0
        %2182 = vmatpush.msra.mxu0 0.0
        %2183 = vmatpush.msra.mxu0 0.0
        %2184 = vmatpush.msra.mxu0 0.0
        %2185 = vmatpush.msra.mxu0 %v1914
        %2186 = vmatpush.msra.mxu0 %v1277
        %2187 = vmatpush.msra.mxu0 %v1272
        %2188 = vmatpush.msra.mxu0 %v1267
        %2189 = vmatpush.msra.mxu0 %v1262
        %2190 = vmatpush.msra.mxu0 %v1257
        %2191 = vmatmul.f32.gmra.mxu0 %v1877
        %v2192 = vpop.f32.mrf.mxu0
        %v2193 = vadd.f32 %v2143, %v2192
        %2194 = vmatmul.f32.gmra.mxu0 %v1880
        %v2195 = vpop.f32.mrf.mxu0
        %v2196 = vadd.f32 %v2146, %v2195
        %2197 = vmatmul.f32.gmra.mxu0 %v1883
        %v2198 = vpop.f32.mrf.mxu0
        %v2199 = vadd.f32 %v2149, %v2198
        %2200 = vmatmul.f32.gmra.mxu0 %v1886
        %v2201 = vpop.f32.mrf.mxu0
        %v2202 = vadd.f32 %v2152, %v2201
        %2203 = vmatmul.f32.gmra.mxu0 %v1889
        %v2204 = vpop.f32.mrf.mxu0
        %v2205 = vadd.f32 %v2155, %v2204
        %2206 = vmatmul.f32.gmra.mxu0 %v1892
        %v2207 = vpop.f32.mrf.mxu0
        %v2208 = vadd.f32 %v2158, %v2207
        %2209 = vmatmul.f32.gmra.mxu0 %v1895
        %v2210 = vpop.f32.mrf.mxu0
        %v2211 = vadd.f32 %v2161, %v2210
        %2212 = vmatmul.f32.gmra.mxu0 %v1898
        %v2213 = vpop.f32.mrf.mxu0
        %v2214 = vadd.f32 %v2164, %v2213
        %2215 = vmatmul.f32.gmra.mxu0 %v1901
        %v2216 = vpop.f32.mrf.mxu0
        %v2217 = vadd.f32 %v2167, %v2216
        %2218 = vmatmul.f32.gmra.mxu0 %v1904
        %v2219 = vpop.f32.mrf.mxu0
        %v2220 = vadd.f32 %v2170, %v2219
        %2221 = vmatmul.f32.gmra.mxu0 %v1907
        %v2222 = vpop.f32.mrf.mxu0
        %v2223 = vadd.f32 %v2173, %v2222
        %2224 = vdwg.mxu0
        %2225 = vmatpush.msra.mxu0 %v1173
        %2226 = vmatpush.msra.mxu0 %v1168
        %2227 = vmatpush.msra.mxu0 %v1163
        %2228 = vmatpush.msra.mxu0 %v1158
        %2229 = vmatpush.msra.mxu0 %v1153
        %2230 = vmatpush.msra.mxu0 %v1148
        %2231 = vmatpush.msra.mxu0 %v1143
        %2232 = vmatpush.msra.mxu0 %v1138
        %2233 = vmatpush.msra.mxu0 %v1133
        %2234 = vmatpush.msra.mxu0 %v1128
        %2235 = vmatpush.msra.mxu0 %v1123
        %2236 = vmatpush.msra.mxu0 %v1118
        %2237 = vmatpush.msra.mxu0 %v1113
        %2238 = vmatpush.msra.mxu0 %v1108
        %2239 = vmatpush.msra.mxu0 %v1103
        %2240 = vmatpush.msra.mxu0 %v1098
        %2241 = vmatmul.f32.gmra.mxu0 %v1842
        %v2242 = vpop.f32.mrf.mxu0
        %v2243 = vadd.f32 0.0, %v2242
        %2244 = vmatmul.f32.gmra.mxu0 %v1845
        %v2245 = vpop.f32.mrf.mxu0
        %v2246 = vadd.f32 0.0, %v2245
        %2247 = vmatmul.f32.gmra.mxu0 %v1848
        %v2248 = vpop.f32.mrf.mxu0
        %v2249 = vadd.f32 0.0, %v2248
        %2250 = vmatmul.f32.gmra.mxu0 %v1851
        %v2251 = vpop.f32.mrf.mxu0
        %v2252 = vadd.f32 0.0, %v2251
        %2253 = vmatmul.f32.gmra.mxu0 %v1854
        %v2254 = vpop.f32.mrf.mxu0
        %v2255 = vadd.f32 0.0, %v2254
        %2256 = vmatmul.f32.gmra.mxu0 %v1857
        %v2257 = vpop.f32.mrf.mxu0
        %v2258 = vadd.f32 0.0, %v2257
        %2259 = vmatmul.f32.gmra.mxu0 %v1860
        %v2260 = vpop.f32.mrf.mxu0
        %v2261 = vadd.f32 0.0, %v2260
        %2262 = vmatmul.f32.gmra.mxu0 %v1863
        %v2263 = vpop.f32.mrf.mxu0
        %v2264 = vadd.f32 0.0, %v2263
        %2265 = vmatmul.f32.gmra.mxu0 %v1866
        %v2266 = vpop.f32.mrf.mxu0
        %v2267 = vadd.f32 0.0, %v2266
        %2268 = vmatmul.f32.gmra.mxu0 %v1869
        %v2269 = vpop.f32.mrf.mxu0
        %v2270 = vadd.f32 0.0, %v2269
        %2271 = vmatmul.f32.gmra.mxu0 %v1872
        %v2272 = vpop.f32.mrf.mxu0
        %v2273 = vadd.f32 0.0, %v2272
        %2274 = vdwg.mxu0
        %2275 = vmatpush.msra.mxu0 %v1253
        %2276 = vmatpush.msra.mxu0 %v1248
        %2277 = vmatpush.msra.mxu0 %v1243
        %2278 = vmatpush.msra.mxu0 %v1238
        %2279 = vmatpush.msra.mxu0 %v1233
        %2280 = vmatpush.msra.mxu0 %v1228
        %2281 = vmatpush.msra.mxu0 %v1223
        %2282 = vmatpush.msra.mxu0 %v1218
        %2283 = vmatpush.msra.mxu0 %v1213
        %2284 = vmatpush.msra.mxu0 %v1208
        %2285 = vmatpush.msra.mxu0 %v1203
        %2286 = vmatpush.msra.mxu0 %v1198
        %2287 = vmatpush.msra.mxu0 %v1193
        %2288 = vmatpush.msra.mxu0 %v1188
        %2289 = vmatpush.msra.mxu0 %v1183
        %2290 = vmatpush.msra.mxu0 %v1178
        %2291 = vmatmul.f32.gmra.mxu0 %v1843
        %v2292 = vpop.f32.mrf.mxu0
        %v2293 = vadd.f32 %v2243, %v2292
        %2294 = vmatmul.f32.gmra.mxu0 %v1846
        %v2295 = vpop.f32.mrf.mxu0
        %v2296 = vadd.f32 %v2246, %v2295
        %2297 = vmatmul.f32.gmra.mxu0 %v1849
        %v2298 = vpop.f32.mrf.mxu0
        %v2299 = vadd.f32 %v2249, %v2298
        %2300 = vmatmul.f32.gmra.mxu0 %v1852
        %v2301 = vpop.f32.mrf.mxu0
        %v2302 = vadd.f32 %v2252, %v2301
        %2303 = vmatmul.f32.gmra.mxu0 %v1855
        %v2304 = vpop.f32.mrf.mxu0
        %v2305 = vadd.f32 %v2255, %v2304
        %2306 = vmatmul.f32.gmra.mxu0 %v1858
        %v2307 = vpop.f32.mrf.mxu0
        %v2308 = vadd.f32 %v2258, %v2307
        %2309 = vmatmul.f32.gmra.mxu0 %v1861
        %v2310 = vpop.f32.mrf.mxu0
        %v2311 = vadd.f32 %v2261, %v2310
        %2312 = vmatmul.f32.gmra.mxu0 %v1864
        %v2313 = vpop.f32.mrf.mxu0
        %v2314 = vadd.f32 %v2264, %v2313
        %2315 = vmatmul.f32.gmra.mxu0 %v1867
        %v2316 = vpop.f32.mrf.mxu0
        %v2317 = vadd.f32 %v2267, %v2316
        %2318 = vmatmul.f32.gmra.mxu0 %v1870
        %v2319 = vpop.f32.mrf.mxu0
        %v2320 = vadd.f32 %v2270, %v2319
        %2321 = vmatmul.f32.gmra.mxu0 %v1873
        %v2322 = vpop.f32.mrf.mxu0
        %v2323 = vadd.f32 %v2273, %v2322
        %2324 = vdwg.mxu0
        %2325 = vmatpush.msra.mxu0 0.0
        %2326 = vmatpush.msra.mxu0 0.0
        %2327 = vmatpush.msra.mxu0 0.0
        %2328 = vmatpush.msra.mxu0 0.0
        %2329 = vmatpush.msra.mxu0 0.0
        %2330 = vmatpush.msra.mxu0 0.0
        %2331 = vmatpush.msra.mxu0 0.0
        %2332 = vmatpush.msra.mxu0 0.0
        %2333 = vmatpush.msra.mxu0 0.0
        %2334 = vmatpush.msra.mxu0 0.0
        %2335 = vmatpush.msra.mxu0 %v1917
        %2336 = vmatpush.msra.mxu0 %v1278
        %2337 = vmatpush.msra.mxu0 %v1273
        %2338 = vmatpush.msra.mxu0 %v1268
        %2339 = vmatpush.msra.mxu0 %v1263
        %2340 = vmatpush.msra.mxu0 %v1258
        %2341 = vmatmul.f32.gmra.mxu0 %v1877
        %v2342 = vpop.f32.mrf.mxu0
        %v2343 = vadd.f32 %v2293, %v2342
        %2344 = vmatmul.f32.gmra.mxu0 %v1880
        %v2345 = vpop.f32.mrf.mxu0
        %v2346 = vadd.f32 %v2296, %v2345
        %2347 = vmatmul.f32.gmra.mxu0 %v1883
        %v2348 = vpop.f32.mrf.mxu0
        %v2349 = vadd.f32 %v2299, %v2348
        %2350 = vmatmul.f32.gmra.mxu0 %v1886
        %v2351 = vpop.f32.mrf.mxu0
        %v2352 = vadd.f32 %v2302, %v2351
        %2353 = vmatmul.f32.gmra.mxu0 %v1889
        %v2354 = vpop.f32.mrf.mxu0
        %v2355 = vadd.f32 %v2305, %v2354
        %2356 = vmatmul.f32.gmra.mxu0 %v1892
        %v2357 = vpop.f32.mrf.mxu0
        %v2358 = vadd.f32 %v2308, %v2357
        %2359 = vmatmul.f32.gmra.mxu0 %v1895
        %v2360 = vpop.f32.mrf.mxu0
        %v2361 = vadd.f32 %v2311, %v2360
        %2362 = vmatmul.f32.gmra.mxu0 %v1898
        %v2363 = vpop.f32.mrf.mxu0
        %v2364 = vadd.f32 %v2314, %v2363
        %2365 = vmatmul.f32.gmra.mxu0 %v1901
        %v2366 = vpop.f32.mrf.mxu0
        %v2367 = vadd.f32 %v2317, %v2366
        %2368 = vmatmul.f32.gmra.mxu0 %v1904
        %v2369 = vpop.f32.mrf.mxu0
        %v2370 = vadd.f32 %v2320, %v2369
        %2371 = vmatmul.f32.gmra.mxu0 %v1907
        %v2372 = vpop.f32.mrf.mxu0
        %v2373 = vadd.f32 %v2323, %v2372
        %2374 = vdwg.mxu0
        %2375 = vmatpush.msra.mxu0 %v1174
        %2376 = vmatpush.msra.mxu0 %v1169
        %2377 = vmatpush.msra.mxu0 %v1164
        %2378 = vmatpush.msra.mxu0 %v1159
        %2379 = vmatpush.msra.mxu0 %v1154
        %2380 = vmatpush.msra.mxu0 %v1149
        %2381 = vmatpush.msra.mxu0 %v1144
        %2382 = vmatpush.msra.mxu0 %v1139
        %2383 = vmatpush.msra.mxu0 %v1134
        %2384 = vmatpush.msra.mxu0 %v1129
        %2385 = vmatpush.msra.mxu0 %v1124
        %2386 = vmatpush.msra.mxu0 %v1119
        %2387 = vmatpush.msra.mxu0 %v1114
        %2388 = vmatpush.msra.mxu0 %v1109
        %2389 = vmatpush.msra.mxu0 %v1104
        %2390 = vmatpush.msra.mxu0 %v1099
        %2391 = vmatmul.f32.gmra.mxu0 %v1842
        %v2392 = vpop.f32.mrf.mxu0
        %v2393 = vadd.f32 0.0, %v2392
        %2394 = vmatmul.f32.gmra.mxu0 %v1845
        %v2395 = vpop.f32.mrf.mxu0
        %v2396 = vadd.f32 0.0, %v2395
        %2397 = vmatmul.f32.gmra.mxu0 %v1848
        %v2398 = vpop.f32.mrf.mxu0
        %v2399 = vadd.f32 0.0, %v2398
        %2400 = vmatmul.f32.gmra.mxu0 %v1851
        %v2401 = vpop.f32.mrf.mxu0
        %v2402 = vadd.f32 0.0, %v2401
        %2403 = vmatmul.f32.gmra.mxu0 %v1854
        %v2404 = vpop.f32.mrf.mxu0
        %v2405 = vadd.f32 0.0, %v2404
        %2406 = vmatmul.f32.gmra.mxu0 %v1857
        %v2407 = vpop.f32.mrf.mxu0
        %v2408 = vadd.f32 0.0, %v2407
        %2409 = vmatmul.f32.gmra.mxu0 %v1860
        %v2410 = vpop.f32.mrf.mxu0
        %v2411 = vadd.f32 0.0, %v2410
        %2412 = vmatmul.f32.gmra.mxu0 %v1863
        %v2413 = vpop.f32.mrf.mxu0
        %v2414 = vadd.f32 0.0, %v2413
        %2415 = vmatmul.f32.gmra.mxu0 %v1866
        %v2416 = vpop.f32.mrf.mxu0
        %v2417 = vadd.f32 0.0, %v2416
        %2418 = vmatmul.f32.gmra.mxu0 %v1869
        %v2419 = vpop.f32.mrf.mxu0
        %v2420 = vadd.f32 0.0, %v2419
        %2421 = vmatmul.f32.gmra.mxu0 %v1872
        %v2422 = vpop.f32.mrf.mxu0
        %v2423 = vadd.f32 0.0, %v2422
        %2424 = vdwg.mxu0
        %2425 = vmatpush.msra.mxu0 %v1254
        %2426 = vmatpush.msra.mxu0 %v1249
        %2427 = vmatpush.msra.mxu0 %v1244
        %2428 = vmatpush.msra.mxu0 %v1239
        %2429 = vmatpush.msra.mxu0 %v1234
        %2430 = vmatpush.msra.mxu0 %v1229
        %2431 = vmatpush.msra.mxu0 %v1224
        %2432 = vmatpush.msra.mxu0 %v1219
        %2433 = vmatpush.msra.mxu0 %v1214
        %2434 = vmatpush.msra.mxu0 %v1209
        %2435 = vmatpush.msra.mxu0 %v1204
        %2436 = vmatpush.msra.mxu0 %v1199
        %2437 = vmatpush.msra.mxu0 %v1194
        %2438 = vmatpush.msra.mxu0 %v1189
        %2439 = vmatpush.msra.mxu0 %v1184
        %2440 = vmatpush.msra.mxu0 %v1179
        %2441 = vmatmul.f32.gmra.mxu0 %v1843
        %v2442 = vpop.f32.mrf.mxu0
        %v2443 = vadd.f32 %v2393, %v2442
        %2444 = vmatmul.f32.gmra.mxu0 %v1846
        %v2445 = vpop.f32.mrf.mxu0
        %v2446 = vadd.f32 %v2396, %v2445
        %2447 = vmatmul.f32.gmra.mxu0 %v1849
        %v2448 = vpop.f32.mrf.mxu0
        %v2449 = vadd.f32 %v2399, %v2448
        %2450 = vmatmul.f32.gmra.mxu0 %v1852
        %v2451 = vpop.f32.mrf.mxu0
        %v2452 = vadd.f32 %v2402, %v2451
        %2453 = vmatmul.f32.gmra.mxu0 %v1855
        %v2454 = vpop.f32.mrf.mxu0
        %v2455 = vadd.f32 %v2405, %v2454
        %2456 = vmatmul.f32.gmra.mxu0 %v1858
        %v2457 = vpop.f32.mrf.mxu0
        %v2458 = vadd.f32 %v2408, %v2457
        %2459 = vmatmul.f32.gmra.mxu0 %v1861
        %v2460 = vpop.f32.mrf.mxu0
        %v2461 = vadd.f32 %v2411, %v2460
        %2462 = vmatmul.f32.gmra.mxu0 %v1864
        %v2463 = vpop.f32.mrf.mxu0
        %v2464 = vadd.f32 %v2414, %v2463
        %2465 = vmatmul.f32.gmra.mxu0 %v1867
        %v2466 = vpop.f32.mrf.mxu0
        %v2467 = vadd.f32 %v2417, %v2466
        %2468 = vmatmul.f32.gmra.mxu0 %v1870
        %v2469 = vpop.f32.mrf.mxu0
        %v2470 = vadd.f32 %v2420, %v2469
        %2471 = vmatmul.f32.gmra.mxu0 %v1873
        %v2472 = vpop.f32.mrf.mxu0
        %v2473 = vadd.f32 %v2423, %v2472
        %2474 = vdwg.mxu0
        %2475 = vmatpush.msra.mxu0 0.0
        %2476 = vmatpush.msra.mxu0 0.0
        %2477 = vmatpush.msra.mxu0 0.0
        %2478 = vmatpush.msra.mxu0 0.0
        %2479 = vmatpush.msra.mxu0 0.0
        %2480 = vmatpush.msra.mxu0 0.0
        %2481 = vmatpush.msra.mxu0 0.0
        %2482 = vmatpush.msra.mxu0 0.0
        %2483 = vmatpush.msra.mxu0 0.0
        %2484 = vmatpush.msra.mxu0 0.0
        %2485 = vmatpush.msra.mxu0 %v1920
        %2486 = vmatpush.msra.mxu0 %v1279
        %2487 = vmatpush.msra.mxu0 %v1274
        %2488 = vmatpush.msra.mxu0 %v1269
        %2489 = vmatpush.msra.mxu0 %v1264
        %2490 = vmatpush.msra.mxu0 %v1259
        %2491 = vmatmul.f32.gmra.mxu0 %v1877
        %v2492 = vpop.f32.mrf.mxu0
        %v2493 = vadd.f32 %v2443, %v2492
        %2494 = vmatmul.f32.gmra.mxu0 %v1880
        %v2495 = vpop.f32.mrf.mxu0
        %v2496 = vadd.f32 %v2446, %v2495
        %2497 = vmatmul.f32.gmra.mxu0 %v1883
        %v2498 = vpop.f32.mrf.mxu0
        %v2499 = vadd.f32 %v2449, %v2498
        %2500 = vmatmul.f32.gmra.mxu0 %v1886
        %v2501 = vpop.f32.mrf.mxu0
        %v2502 = vadd.f32 %v2452, %v2501
        %2503 = vmatmul.f32.gmra.mxu0 %v1889
        %v2504 = vpop.f32.mrf.mxu0
        %v2505 = vadd.f32 %v2455, %v2504
        %2506 = vmatmul.f32.gmra.mxu0 %v1892
        %v2507 = vpop.f32.mrf.mxu0
        %v2508 = vadd.f32 %v2458, %v2507
        %2509 = vmatmul.f32.gmra.mxu0 %v1895
        %v2510 = vpop.f32.mrf.mxu0
        %v2511 = vadd.f32 %v2461, %v2510
        %2512 = vmatmul.f32.gmra.mxu0 %v1898
        %v2513 = vpop.f32.mrf.mxu0
        %v2514 = vadd.f32 %v2464, %v2513
        %2515 = vmatmul.f32.gmra.mxu0 %v1901
        %v2516 = vpop.f32.mrf.mxu0
        %v2517 = vadd.f32 %v2467, %v2516
        %2518 = vmatmul.f32.gmra.mxu0 %v1904
        %v2519 = vpop.f32.mrf.mxu0
        %v2520 = vadd.f32 %v2470, %v2519
        %2521 = vmatmul.f32.gmra.mxu0 %v1907
        %v2522 = vpop.f32.mrf.mxu0
        %v2523 = vadd.f32 %v2473, %v2522
        %2524 = vdwg.mxu0
        %2525 = vmatpush.msra.mxu0 %v1175
        %2526 = vmatpush.msra.mxu0 %v1170
        %2527 = vmatpush.msra.mxu0 %v1165
        %2528 = vmatpush.msra.mxu0 %v1160
        %2529 = vmatpush.msra.mxu0 %v1155
        %2530 = vmatpush.msra.mxu0 %v1150
        %2531 = vmatpush.msra.mxu0 %v1145
        %2532 = vmatpush.msra.mxu0 %v1140
        %2533 = vmatpush.msra.mxu0 %v1135
        %2534 = vmatpush.msra.mxu0 %v1130
        %2535 = vmatpush.msra.mxu0 %v1125
        %2536 = vmatpush.msra.mxu0 %v1120
        %2537 = vmatpush.msra.mxu0 %v1115
        %2538 = vmatpush.msra.mxu0 %v1110
        %2539 = vmatpush.msra.mxu0 %v1105
        %2540 = vmatpush.msra.mxu0 %v1100
        %2541 = vmatmul.f32.gmra.mxu0 %v1842
        %v2542 = vpop.f32.mrf.mxu0
        %v2543 = vadd.f32 0.0, %v2542
        %2544 = vmatmul.f32.gmra.mxu0 %v1845
        %v2545 = vpop.f32.mrf.mxu0
        %v2546 = vadd.f32 0.0, %v2545
        %2547 = vmatmul.f32.gmra.mxu0 %v1848
        %v2548 = vpop.f32.mrf.mxu0
        %v2549 = vadd.f32 0.0, %v2548
        %2550 = vmatmul.f32.gmra.mxu0 %v1851
        %v2551 = vpop.f32.mrf.mxu0
        %v2552 = vadd.f32 0.0, %v2551
        %2553 = vmatmul.f32.gmra.mxu0 %v1854
        %v2554 = vpop.f32.mrf.mxu0
        %v2555 = vadd.f32 0.0, %v2554
        %2556 = vmatmul.f32.gmra.mxu0 %v1857
        %v2557 = vpop.f32.mrf.mxu0
        %v2558 = vadd.f32 0.0, %v2557
        %2559 = vmatmul.f32.gmra.mxu0 %v1860
        %v2560 = vpop.f32.mrf.mxu0
        %v2561 = vadd.f32 0.0, %v2560
        %2562 = vmatmul.f32.gmra.mxu0 %v1863
        %v2563 = vpop.f32.mrf.mxu0
        %v2564 = vadd.f32 0.0, %v2563
        %2565 = vmatmul.f32.gmra.mxu0 %v1866
        %v2566 = vpop.f32.mrf.mxu0
        %v2567 = vadd.f32 0.0, %v2566
        %2568 = vmatmul.f32.gmra.mxu0 %v1869
        %v2569 = vpop.f32.mrf.mxu0
        %v2570 = vadd.f32 0.0, %v2569
        %2571 = vmatmul.f32.gmra.mxu0 %v1872
        %v2572 = vpop.f32.mrf.mxu0
        %v2573 = vadd.f32 0.0, %v2572
        %2574 = vdwg.mxu0
        %2575 = vmatpush.msra.mxu0 %v1255
        %2576 = vmatpush.msra.mxu0 %v1250
        %2577 = vmatpush.msra.mxu0 %v1245
        %2578 = vmatpush.msra.mxu0 %v1240
        %2579 = vmatpush.msra.mxu0 %v1235
        %2580 = vmatpush.msra.mxu0 %v1230
        %2581 = vmatpush.msra.mxu0 %v1225
        %2582 = vmatpush.msra.mxu0 %v1220
        %2583 = vmatpush.msra.mxu0 %v1215
        %2584 = vmatpush.msra.mxu0 %v1210
        %2585 = vmatpush.msra.mxu0 %v1205
        %2586 = vmatpush.msra.mxu0 %v1200
        %2587 = vmatpush.msra.mxu0 %v1195
        %2588 = vmatpush.msra.mxu0 %v1190
        %2589 = vmatpush.msra.mxu0 %v1185
        %2590 = vmatpush.msra.mxu0 %v1180
        %2591 = vmatmul.f32.gmra.mxu0 %v1843
        %v2592 = vpop.f32.mrf.mxu0
        %v2593 = vadd.f32 %v2543, %v2592
        %2594 = vmatmul.f32.gmra.mxu0 %v1846
        %v2595 = vpop.f32.mrf.mxu0
        %v2596 = vadd.f32 %v2546, %v2595
        %2597 = vmatmul.f32.gmra.mxu0 %v1849
        %v2598 = vpop.f32.mrf.mxu0
        %v2599 = vadd.f32 %v2549, %v2598
        %2600 = vmatmul.f32.gmra.mxu0 %v1852
        %v2601 = vpop.f32.mrf.mxu0
        %v2602 = vadd.f32 %v2552, %v2601
        %2603 = vmatmul.f32.gmra.mxu0 %v1855
        %v2604 = vpop.f32.mrf.mxu0
        %v2605 = vadd.f32 %v2555, %v2604
        %2606 = vmatmul.f32.gmra.mxu0 %v1858
        %v2607 = vpop.f32.mrf.mxu0
        %v2608 = vadd.f32 %v2558, %v2607
        %2609 = vmatmul.f32.gmra.mxu0 %v1861
        %v2610 = vpop.f32.mrf.mxu0
        %v2611 = vadd.f32 %v2561, %v2610
        %2612 = vmatmul.f32.gmra.mxu0 %v1864
        %v2613 = vpop.f32.mrf.mxu0
        %v2614 = vadd.f32 %v2564, %v2613
        %2615 = vmatmul.f32.gmra.mxu0 %v1867
        %v2616 = vpop.f32.mrf.mxu0
        %v2617 = vadd.f32 %v2567, %v2616
        %2618 = vmatmul.f32.gmra.mxu0 %v1870
        %v2619 = vpop.f32.mrf.mxu0
        %v2620 = vadd.f32 %v2570, %v2619
        %2621 = vmatmul.f32.gmra.mxu0 %v1873
        %v2622 = vpop.f32.mrf.mxu0
        %v2623 = vadd.f32 %v2573, %v2622
        %2624 = vdwg.mxu0
        %2625 = vmatpush.msra.mxu0 0.0
        %2626 = vmatpush.msra.mxu0 0.0
        %2627 = vmatpush.msra.mxu0 0.0
        %2628 = vmatpush.msra.mxu0 0.0
        %2629 = vmatpush.msra.mxu0 0.0
        %2630 = vmatpush.msra.mxu0 0.0
        %2631 = vmatpush.msra.mxu0 0.0
        %2632 = vmatpush.msra.mxu0 0.0
        %2633 = vmatpush.msra.mxu0 0.0
        %2634 = vmatpush.msra.mxu0 0.0
        %2635 = vmatpush.msra.mxu0 %v1923
        %2636 = vmatpush.msra.mxu0 %v1280
        %2637 = vmatpush.msra.mxu0 %v1275
        %2638 = vmatpush.msra.mxu0 %v1270
        %2639 = vmatpush.msra.mxu0 %v1265
        %2640 = vmatpush.msra.mxu0 %v1260
        %2641 = vmatmul.f32.gmra.mxu0 %v1877
        %v2642 = vpop.f32.mrf.mxu0
        %v2643 = vadd.f32 %v2593, %v2642
        %2644 = vmatmul.f32.gmra.mxu0 %v1880
        %v2645 = vpop.f32.mrf.mxu0
        %v2646 = vadd.f32 %v2596, %v2645
        %2647 = vmatmul.f32.gmra.mxu0 %v1883
        %v2648 = vpop.f32.mrf.mxu0
        %v2649 = vadd.f32 %v2599, %v2648
        %2650 = vmatmul.f32.gmra.mxu0 %v1886
        %v2651 = vpop.f32.mrf.mxu0
        %v2652 = vadd.f32 %v2602, %v2651
        %2653 = vmatmul.f32.gmra.mxu0 %v1889
        %v2654 = vpop.f32.mrf.mxu0
        %v2655 = vadd.f32 %v2605, %v2654
        %2656 = vmatmul.f32.gmra.mxu0 %v1892
        %v2657 = vpop.f32.mrf.mxu0
        %v2658 = vadd.f32 %v2608, %v2657
        %2659 = vmatmul.f32.gmra.mxu0 %v1895
        %v2660 = vpop.f32.mrf.mxu0
        %v2661 = vadd.f32 %v2611, %v2660
        %2662 = vmatmul.f32.gmra.mxu0 %v1898
        %v2663 = vpop.f32.mrf.mxu0
        %v2664 = vadd.f32 %v2614, %v2663
        %2665 = vmatmul.f32.gmra.mxu0 %v1901
        %v2666 = vpop.f32.mrf.mxu0
        %v2667 = vadd.f32 %v2617, %v2666
        %2668 = vmatmul.f32.gmra.mxu0 %v1904
        %v2669 = vpop.f32.mrf.mxu0
        %v2670 = vadd.f32 %v2620, %v2669
        %2671 = vmatmul.f32.gmra.mxu0 %v1907
        %v2672 = vpop.f32.mrf.mxu0
        %v2673 = vadd.f32 %v2623, %v2672
        %2674 = vdwg.mxu0
        %v2675 = vmul.f32 %v1410, %v2043
        %v2676 = vmul.f32 %v1510, %v2193
        %v2677 = vmul.f32 %v1610, %v2343
        %v2678 = vmul.f32 %v1710, %v2493
        %v2679 = vmul.f32 %v1810, %v2643
        %v2680 = vmul.f32 %v1413, %v2046
        %v2681 = vmul.f32 %v1513, %v2196
        %v2682 = vmul.f32 %v1613, %v2346
        %v2683 = vmul.f32 %v1713, %v2496
        %v2684 = vmul.f32 %v1813, %v2646
        %v2685 = vmul.f32 %v1416, %v2049
        %v2686 = vmul.f32 %v1516, %v2199
        %v2687 = vmul.f32 %v1616, %v2349
        %v2688 = vmul.f32 %v1716, %v2499
        %v2689 = vmul.f32 %v1816, %v2649
        %v2690 = vmul.f32 %v1419, %v2052
        %v2691 = vmul.f32 %v1519, %v2202
        %v2692 = vmul.f32 %v1619, %v2352
        %v2693 = vmul.f32 %v1719, %v2502
        %v2694 = vmul.f32 %v1819, %v2652
        %v2695 = vmul.f32 %v1422, %v2055
        %v2696 = vmul.f32 %v1522, %v2205
        %v2697 = vmul.f32 %v1622, %v2355
        %v2698 = vmul.f32 %v1722, %v2505
        %v2699 = vmul.f32 %v1822, %v2655
        %v2700 = vmul.f32 %v1425, %v2058
        %v2701 = vmul.f32 %v1525, %v2208
        %v2702 = vmul.f32 %v1625, %v2358
        %v2703 = vmul.f32 %v1725, %v2508
        %v2704 = vmul.f32 %v1825, %v2658
        %v2705 = vmul.f32 %v1428, %v2061
        %v2706 = vmul.f32 %v1528, %v2211
        %v2707 = vmul.f32 %v1628, %v2361
        %v2708 = vmul.f32 %v1728, %v2511
        %v2709 = vmul.f32 %v1828, %v2661
        %v2710 = vmul.f32 %v1431, %v2064
        %v2711 = vmul.f32 %v1531, %v2214
        %v2712 = vmul.f32 %v1631, %v2364
        %v2713 = vmul.f32 %v1731, %v2514
        %v2714 = vmul.f32 %v1831, %v2664
        %v2715 = vmul.f32 %v1434, %v2067
        %v2716 = vmul.f32 %v1534, %v2217
        %v2717 = vmul.f32 %v1634, %v2367
        %v2718 = vmul.f32 %v1734, %v2517
        %v2719 = vmul.f32 %v1834, %v2667
        %v2720 = vmul.f32 %v1437, %v2070
        %v2721 = vmul.f32 %v1537, %v2220
        %v2722 = vmul.f32 %v1637, %v2370
        %v2723 = vmul.f32 %v1737, %v2520
        %v2724 = vmul.f32 %v1837, %v2670
        %v2725 = vmul.f32 %v1440, %v2073
        %v2726 = vmul.f32 %v1540, %v2223
        %v2727 = vmul.f32 %v1640, %v2373
        %v2728 = vmul.f32 %v1740, %v2523
        %v2729 = vmul.f32 %v1840, %v2673
        %v2730 = vadd.f32 %v2675, %v2680
        %v2731 = vadd.f32 %v2730, %v2685
        %v2732 = vadd.f32 %v2731, %v2690
        %v2733 = vadd.f32 %v2732, %v2695
        %v2734 = vadd.f32 %v2733, %v2700
        %v2735 = vadd.f32 %v2734, %v2705
        %v2736 = vadd.f32 %v2735, %v2710
        %v2737 = vadd.f32 %v2736, %v2715
        %v2738 = vadd.f32 %v2737, %v2720
        %vm2739 = vcmask 1045504
        %v2740 = vsel %vm2739, %v2725, 0.0
        %v2741 = vadd.f32 %v2738, %v2740
        %v2742 = vrot.slane %v2741, 4
        %v2743 = vadd.f32 %v2741, %v2742
        %v2744 = vrot.slane %v2743, 2
        %v2745 = vadd.f32 %v2743, %v2744
        %v2746 = vrot.slane %v2745, 1
        %v2747 = vadd.f32 %v2745, %v2746
        %v2748 = vadd.f32 %v2676, %v2681
        %v2749 = vadd.f32 %v2748, %v2686
        %v2750 = vadd.f32 %v2749, %v2691
        %v2751 = vadd.f32 %v2750, %v2696
        %v2752 = vadd.f32 %v2751, %v2701
        %v2753 = vadd.f32 %v2752, %v2706
        %v2754 = vadd.f32 %v2753, %v2711
        %v2755 = vadd.f32 %v2754, %v2716
        %v2756 = vadd.f32 %v2755, %v2721
        %v2757 = vsel %vm2739, %v2726, 0.0
        %v2758 = vadd.f32 %v2756, %v2757
        %v2759 = vrot.slane %v2758, 4
        %v2760 = vadd.f32 %v2758, %v2759
        %v2761 = vrot.slane %v2760, 2
        %v2762 = vadd.f32 %v2760, %v2761
        %v2763 = vrot.slane %v2762, 1
        %v2764 = vadd.f32 %v2762, %v2763
        %v2765 = vadd.f32 %v2677, %v2682
        %v2766 = vadd.f32 %v2765, %v2687
        %v2767 = vadd.f32 %v2766, %v2692
        %v2768 = vadd.f32 %v2767, %v2697
        %v2769 = vadd.f32 %v2768, %v2702
        %v2770 = vadd.f32 %v2769, %v2707
        %v2771 = vadd.f32 %v2770, %v2712
        %v2772 = vadd.f32 %v2771, %v2717
        %v2773 = vadd.f32 %v2772, %v2722
        %v2774 = vsel %vm2739, %v2727, 0.0
        %v2775 = vadd.f32 %v2773, %v2774
        %v2776 = vrot.slane %v2775, 4
        %v2777 = vadd.f32 %v2775, %v2776
        %v2778 = vrot.slane %v2777, 2
        %v2779 = vadd.f32 %v2777, %v2778
        %v2780 = vrot.slane %v2779, 1
        %v2781 = vadd.f32 %v2779, %v2780
        %v2782 = vadd.f32 %v2678, %v2683
        %v2783 = vadd.f32 %v2782, %v2688
        %v2784 = vadd.f32 %v2783, %v2693
        %v2785 = vadd.f32 %v2784, %v2698
        %v2786 = vadd.f32 %v2785, %v2703
        %v2787 = vadd.f32 %v2786, %v2708
        %v2788 = vadd.f32 %v2787, %v2713
        %v2789 = vadd.f32 %v2788, %v2718
        %v2790 = vadd.f32 %v2789, %v2723
        %v2791 = vsel %vm2739, %v2728, 0.0
        %v2792 = vadd.f32 %v2790, %v2791
        %v2793 = vrot.slane %v2792, 4
        %v2794 = vadd.f32 %v2792, %v2793
        %v2795 = vrot.slane %v2794, 2
        %v2796 = vadd.f32 %v2794, %v2795
        %v2797 = vrot.slane %v2796, 1
        %v2798 = vadd.f32 %v2796, %v2797
        %v2799 = vadd.f32 %v2679, %v2684
        %v2800 = vadd.f32 %v2799, %v2689
        %v2801 = vadd.f32 %v2800, %v2694
        %v2802 = vadd.f32 %v2801, %v2699
        %v2803 = vadd.f32 %v2802, %v2704
        %v2804 = vadd.f32 %v2803, %v2709
        %v2805 = vadd.f32 %v2804, %v2714
        %v2806 = vadd.f32 %v2805, %v2719
        %v2807 = vadd.f32 %v2806, %v2724
        %v2808 = vsel %vm2739, %v2729, 0.0
        %v2809 = vadd.f32 %v2807, %v2808
        %v2810 = vrot.slane %v2809, 4
        %v2811 = vadd.f32 %v2809, %v2810
        %v2812 = vrot.slane %v2811, 2
        %v2813 = vadd.f32 %v2811, %v2812
        %v2814 = vrot.slane %v2813, 1
        %v2815 = vadd.f32 %v2813, %v2814
        %v2821 = vrot.slane %v2764, 7
        %v2822 = vrot.slane %v2781, 6
        %v2823 = vrot.slane %v2798, 5
        %v2824 = vrot.slane %v2815, 4
        %vm2825 = vcmask 1040384
        %v2826 = vsel %vm2825, %v2747, %v2821
        %vm2827 = vcmask 1041408
        %v2828 = vsel %vm2827, %v2826, %v2822
        %vm2829 = vcmask 1043459
        %v2830 = vsel %vm2829, %v2823, %v2824
        %vm2831 = vcmask 1042432
        %v2832 = vsel %vm2831, %v2828, %v2830
        %v2834 = vlaneseq
        %vm2835 = vcmp.ge.s32.totalorder %v2834, 0
        %vm2836 = vcmp.lt.s32.totalorder %v2834, 640
        %vm2837 = vmand %vm2835, %vm2836
        %2838 = vst.msk [vmem:[%s286] sm:$0x1f] %vm2837, %v2832
        %s2839 = sand.u32 %s127, 1
        %s2840 = scalar_lea.sflag [#allocation4], %s2839
        %s2841 = sand.u32 %s127, 1
        %s2842 = smul.addr %s2841, 5
        %s2843 = scalar_lea.vmem [#allocation10], %s2842
        // Predicated region
        $region53: #{tpu_custom_call.1} parent=35 // pred_check
          %p2844 = pneg %p137
        $region54: #{tpu_custom_call.1} parent=35 // pred_check_branch
          %2846 = sbr.rel (%p2844) target = $region56
        $region55: #{tpu_custom_call.1} parent=35 // pred_region
          %s2847 = smul.u32 5, %s25
          %2849 = vsyncadd %s2840, 0
          %s2850 = scalar_lea.hbm %s4, %s2847
          %s2852 = sshll.u32 %s2843, 4
          %s2853 = int_to_ptr.vmem [resolvable:$true] %s2852
          %s2854 = sshll.u32 %s2850, 4
          %s2855 = int_to_ptr.hbm [resolvable:$true] %s2854
          %2857 = dma.vmem_to_hbm [thread:$0]  %s2853, 80, %s2855, %s2840
        $region56: #{tpu_custom_call.1} parent=35 // pred_fallthru
          _
      $region36: #{tpu_custom_call.1} parent=5 // pred_fallthru
        _
      %p2858 = scmp.le.s32.totalorder 2, %s20
      // Predicated region
      $region57: #{tpu_custom_call.1} parent=5 // pred_check
        %p2859 = pneg %p2858
      $region58: #{tpu_custom_call.1} parent=5 // pred_check_branch
        %2861 = sbr.rel (%p2859) target = $region60
      $region59: #{tpu_custom_call.1} parent=5 // pred_region
        %s2862 = ssub.s32 %s20, 2
        // Predicated region
        $region61: #{tpu_custom_call.1} parent=59 // pred_check
          %p2863 = pneg %p143
        $region62: #{tpu_custom_call.1} parent=59 // pred_check_branch
          %2865 = sbr.rel (%p2863) target = $region64
        $region63: #{tpu_custom_call.1} parent=59 // pred_region
          %s2866 = sand.u32 %s128, 1
          %s2867 = scalar_lea.sflag [#allocation4], %s2866
          %s2868 = sand.u32 %s128, 1
          %s2869 = smul.addr %s2868, 5
          %s2870 = scalar_lea.vmem [#allocation10], %s2869
          %2872 = dma.done %s2867, 80
        $region64: #{tpu_custom_call.1} parent=59 // pred_fallthru
          _
      $region60: #{tpu_custom_call.1} parent=5 // pred_fallthru
        _
    $region6: #{tpu_custom_call.1} parent=1 // loop_footer
      %s24 = sadd.s32 1, %s20
    $region7: #{tpu_custom_call.1} parent=1 // loop_footer_branch
      %19 = sbr.rel target = $region3
    $region8: #{tpu_custom_call.1} parent=1 // loop_exit
      _
    %2873 = vsyncpa [#allocation3], 1
    %s2874 = scalar_lea.sflag [#allocation3], 1
    %2875 = vsyncpa %s2874, 1
    %2876 = vsyncpa [#allocation6], 1
    %s2877 = scalar_lea.sflag [#allocation6], 1
    %2878 = vsyncpa %s2877, 1
    %2879 = vsyncpa [#allocation9], 1
    %2880 = vsyncpa [#allocation4], 1
    %s2881 = scalar_lea.sflag [#allocation4], 1
    %2882 = vsyncpa %s2881, 1

</llo_original>
